<compile_context>
chip_gen: v6e
topology: v6e:2x2x1
jax: 0.10.0
libtpu: 0.0.40
codegen_flags: <defaults>
</compile_context>

<pallas_src>
import jax
import jax.numpy as jnp
from jax.experimental import pallas as pl
from jax.experimental.pallas import tpu as pltpu


def _round_up(x, m):
    return ((x + m - 1) // m) * m


def head_kernel(x_ref, w_ref, b_ref, o_ref, acc_ref):
    # x_ref:   (TILE_N, TILE_K)  activations, lane-dense (TILE_K % 128 == 0)
    # w_ref:   (TILE_K, K_PAD)   pool-folded, HW-expanded fc weight slab
    # b_ref:   (1, K_PAD)        bias (f32)
    # o_ref:   (TILE_N, K_PAD)   logits (f32), lane-dense
    # acc_ref: (TILE_N, K_PAD)   f32 accumulator, resident across the k axis
    k = pl.program_id(1)

    @pl.when(k == 0)
    def _():
        acc_ref[...] = jnp.zeros_like(acc_ref)

    acc_ref[...] += jnp.dot(x_ref[...], w_ref[...],
                            preferred_element_type=jnp.float32)

    @pl.when(k == pl.num_programs(1) - 1)
    def _():
        o_ref[...] = (acc_ref[...] + b_ref[...]).astype(o_ref.dtype)


def resnet_back(x_nchw, w, b, *, tile_n=None, tile_k=None):
    """Pool(1x1) + Linear head.

    x_nchw: (N, C, H, W) f32 or bf16; w: (num_classes, C) [PyTorch layout];
    b: (num_classes,).  Returns (N, num_classes) f32 logits.
    """
    N, C, H, W = x_nchw.shape
    num_classes = w.shape[0]
    HW = H * W
    K = C * HW

    # Compute dtype: keep bf16 activations bf16 (halves the dominant HBM read),
    # otherwise f32.  MXU accumulation is always f32.
    cdtype = jnp.bfloat16 if x_nchw.dtype == jnp.bfloat16 else jnp.float32
    bpe = jnp.dtype(cdtype).itemsize

    # Lane-dense class dim: pad to a multiple of 128 (unmasked vst), slice after.
    k_pad = _round_up(num_classes, 128)

    # --- tile selection -----------------------------------------------------
    if tile_n is None:
        if N <= 16:
            tile_n = N                       # tiny batch: single block, launch-bound anyway
        else:
            # >=2 (typically 4+) batch blocks so v7x's two TensorCores both work,
            # capped at 128 rows; multiple of 8 for the sublane constraint.
            tile_n = min(128, _round_up(pl.cdiv(N, 4), 8))
    if tile_k is None:
        # Keep each single buffer (activation block, weight block) around <=2 MiB
        # so double-buffered totals fit v5e's 16 MiB scoped VMEM (and easily
        # v6e/v7x's 32 MiB).
        per_buf_bytes = 2 * 1024 * 1024
        tile_k = per_buf_bytes // (max(tile_n, k_pad) * bpe)
        tile_k = max(128, (tile_k // 128) * 128)
    tile_k = min(tile_k, _round_up(K, 128))
    k_total = _round_up(K, tile_k)           # zero-padded contraction length
    k_steps = k_total // tile_k

    # --- wrapper-side layout prep (one-time, outside the hot loop) ----------
    # Free reshape (HW contiguous in NCHW): (N, C, H, W) -> (N, C*HW).
    x2 = x_nchw.reshape(N, K).astype(cdtype)
    if k_total != K:
        x2 = jnp.pad(x2, ((0, 0), (0, k_total - K)))   # zeros: exact

    # Fold the 1/HW pool scale into W^T and expand each channel row HW times so
    # the pooled-dot becomes a single contraction over K = C*HW.
    w_t = jnp.transpose(w, (1, 0)).astype(jnp.float32) * (1.0 / HW)   # (C, num_classes)
    w_exp = jnp.repeat(w_t, HW, axis=0)                               # (K, num_classes)
    w_exp = jnp.pad(w_exp, ((0, k_total - K), (0, k_pad - num_classes)))
    w_exp = w_exp.astype(cdtype)

    b2 = jnp.pad(b.astype(jnp.float32).reshape(1, num_classes),
                 ((0, 0), (0, k_pad - num_classes)))

    grid = (pl.cdiv(N, tile_n), k_steps)

    cost = pl.CostEstimate(
        flops=2 * N * k_total * k_pad,
        transcendentals=0,
        bytes_accessed=bpe * (N * k_total + k_total * k_pad)
        + 4 * (k_pad + N * k_pad),
    )

    out_padded = pl.pallas_call(
        head_kernel,
        out_shape=jax.ShapeDtypeStruct((N, k_pad), jnp.float32),
        grid_spec=pltpu.PrefetchScalarGridSpec(
            num_scalar_prefetch=0,
            grid=grid,
            in_specs=[
                pl.BlockSpec((tile_n, tile_k), lambda i, k: (i, k)),   # activation stream
                pl.BlockSpec((tile_k, k_pad), lambda i, k: (k, 0)),    # weight slab per k-step
                pl.BlockSpec((1, k_pad), lambda i, k: (0, 0)),         # bias (tiny, resident)
            ],
            out_specs=pl.BlockSpec((tile_n, k_pad), lambda i, k: (i, 0)),
            scratch_shapes=[pltpu.VMEM((tile_n, k_pad), jnp.float32)],
        ),
        compiler_params=pltpu.CompilerParams(
            # batch blocks split across TCs (v7x megacore); K is a reduction.
            dimension_semantics=("parallel", "arbitrary"),
        ),
        cost_estimate=cost,
    )(x2, w_exp, b2)

    return out_padded[:, :num_classes]


if __name__ == "__main__":
    # config='18' => in_feat = 512, num_classes = 10
    N, C, H, W = 2, 512, 4, 4
    num_classes = 10

    key = jax.random.PRNGKey(0)
    kx, kw, kb = jax.random.split(key, 3)

    x = jax.random.normal(kx, (N, C, H, W), dtype=jnp.float32)
    # Deterministic Linear init (PyTorch-style U(-1/sqrt(in), 1/sqrt(in)))
    bound = 1.0 / jnp.sqrt(jnp.float32(C))
    w = jax.random.uniform(kw, (num_classes, C), jnp.float32, -bound, bound)
    b = jax.random.uniform(kb, (num_classes,), jnp.float32, -bound, bound)

    # Reference in plain JAX (pool -> flatten -> linear)
    ref = jnp.mean(x, axis=(2, 3)) @ w.T + b

    # f32 path
    out = jax.block_until_ready(resnet_back(x, w, b))
    assert out.shape == (N, num_classes)
    assert jnp.allclose(out, ref, atol=2e-4, rtol=2e-4)

    # bf16 activation path (the bandwidth-bound production case)
    out_bf16 = jax.block_until_ready(resnet_back(x.astype(jnp.bfloat16), w, b))
    assert out_bf16.shape == (N, num_classes)
    assert jnp.allclose(out_bf16, ref, atol=3e-2, rtol=3e-2)

    print("KERNEL_OK")
</pallas_src>

<mosaic_0001>
module attributes {stable_mosaic.version = 11 : i64} {
  func.func @head_kernel(%arg0: i32, %arg1: i32, %arg2: memref<2x4096xf32, #tpu.memory_space<vmem>>, %arg3: memref<4096x128xf32, #tpu.memory_space<vmem>>, %arg4: memref<1x128xf32, #tpu.memory_space<vmem>>, %arg5: memref<2x128xf32, #tpu.memory_space<vmem>>, %arg6: memref<2x128xf32, #tpu.memory_space<vmem>>) attributes {dimension_semantics = [#tpu.dimension_semantics<parallel>, #tpu.dimension_semantics<arbitrary>], iteration_bounds = array<i64: 1, 2>, scalar_prefetch = 0 : i64, scratch_operands = 1 : i64, tpu.core_type = #tpu.core_type<tc>, window_params = [{transform_indices = @transform_0, window_bounds = array<i64: 2, 4096>}, {transform_indices = @transform_1, window_bounds = array<i64: 4096, 128>}, {pipeline_mode = #tpu.pipeline_mode<synchronous>, transform_indices = @transform_2, window_bounds = array<i64: 1, 128>}, {transform_indices = @transform_3, window_bounds = array<i64: 2, 128>}]} {
    %c0_i32 = arith.constant 0 : i32
    %0 = arith.cmpi eq, %arg1, %c0_i32 : i32
    %1 = arith.extui %0 : i1 to i32
    %c0_i32_0 = arith.constant 0 : i32
    %2 = arith.cmpi ne, %1, %c0_i32_0 : i32
    scf.if %2 {
      %cst_9 = arith.constant 0.000000e+00 : f32
      %12 = vector.broadcast %cst_9 : f32 to vector<2x128xf32>
      %c0_10 = arith.constant 0 : index
      %c0_11 = arith.constant 0 : index
      %13 = vector.load %arg6[%c0_10, %c0_11] : memref<2x128xf32, #tpu.memory_space<vmem>>, vector<2x128xf32>
      tpu.vector_store %arg6[%c0_10, %c0_11], %12 {strides = array<i32>} : memref<2x128xf32, #tpu.memory_space<vmem>>, vector<2x128xf32>,
    } else {
    }
    %c0 = arith.constant 0 : index
    %c0_1 = arith.constant 0 : index
    %3 = vector.load %arg6[%c0, %c0_1] : memref<2x128xf32, #tpu.memory_space<vmem>>, vector<2x128xf32>
    %c0_2 = arith.constant 0 : index
    %c0_3 = arith.constant 0 : index
    %4 = vector.load %arg2[%c0_2, %c0_3] : memref<2x4096xf32, #tpu.memory_space<vmem>>, vector<2x4096xf32>
    %c0_4 = arith.constant 0 : index
    %c0_5 = arith.constant 0 : index
    %5 = vector.load %arg3[%c0_4, %c0_5] : memref<4096x128xf32, #tpu.memory_space<vmem>>, vector<4096x128xf32>
    %cst = arith.constant dense<0.000000e+00> : vector<2x128xf32>
    %6 = tpu.matmul %4, %5, %cst {dimension_numbers = #tpu.dot_dimension_numbers<[1], [0], [0], [1], [0, 0, 1, 1], [], []>} : vector<2x4096xf32>, vector<4096x128xf32>, vector<2x128xf32> -> vector<2x128xf32>
    %7 = arith.addf %3, %6 : vector<2x128xf32>
    %c0_6 = arith.constant 0 : index
    %c0_7 = arith.constant 0 : index
    %8 = vector.load %arg6[%c0_6, %c0_7] : memref<2x128xf32, #tpu.memory_space<vmem>>, vector<2x128xf32>
    tpu.vector_store %arg6[%c0_6, %c0_7], %7 {strides = array<i32>} : memref<2x128xf32, #tpu.memory_space<vmem>>, vector<2x128xf32>,
    %c1_i32 = arith.constant 1 : i32
    %9 = arith.cmpi eq, %arg1, %c1_i32 : i32
    %10 = arith.extui %9 : i1 to i32
    %c0_i32_8 = arith.constant 0 : i32
    %11 = arith.cmpi ne, %10, %c0_i32_8 : i32
    scf.if %11 {
      %c0_9 = arith.constant 0 : index
      %c0_10 = arith.constant 0 : index
      %12 = vector.load %arg6[%c0_9, %c0_10] : memref<2x128xf32, #tpu.memory_space<vmem>>, vector<2x128xf32>
      %c0_11 = arith.constant 0 : index
      %c0_12 = arith.constant 0 : index
      %13 = vector.load %arg4[%c0_11, %c0_12] : memref<1x128xf32, #tpu.memory_space<vmem>>, vector<1x128xf32>
      %14 = vector.broadcast %13 : vector<1x128xf32> to vector<2x128xf32>
      %15 = arith.addf %12, %14 : vector<2x128xf32>
      %c0_13 = arith.constant 0 : index
      %c0_14 = arith.constant 0 : index
      %16 = vector.load %arg5[%c0_13, %c0_14] : memref<2x128xf32, #tpu.memory_space<vmem>>, vector<2x128xf32>
      tpu.vector_store %arg5[%c0_13, %c0_14], %15 {strides = array<i32>} : memref<2x128xf32, #tpu.memory_space<vmem>>, vector<2x128xf32>,
    } else {
    }
    return
  }
  func.func @transform_0(%arg0: i32, %arg1: i32) -> (i32, i32) {
    %c0_i32 = arith.constant 0 : i32
    return %arg0, %arg1 : i32, i32
  }
  func.func @transform_1(%arg0: i32, %arg1: i32) -> (i32, i32) {
    %c0_i32 = arith.constant 0 : i32
    %c0_i32_0 = arith.constant 0 : i32
    return %arg1, %c0_i32 : i32, i32
  }
  func.func @transform_2(%arg0: i32, %arg1: i32) -> (i32, i32) {
    %c0_i32 = arith.constant 0 : i32
    %c0_i32_0 = arith.constant 0 : i32
    %c0_i32_1 = arith.constant 0 : i32
    return %c0_i32, %c0_i32_0 : i32, i32
  }
  func.func @transform_3(%arg0: i32, %arg1: i32) -> (i32, i32) {
    %c0_i32 = arith.constant 0 : i32
    %c0_i32_0 = arith.constant 0 : i32
    return %arg0, %c0_i32 : i32, i32
  }
}

</mosaic_0001>

<llo_original>
// kernel: tpu_custom_call.1
$region0: #{tpu_custom_call.1}
  #allocation0 [shape = 'u32[]', space=smem, size = 0x4, offset = 0x4, fixed_abs, tag = 'smem constant byte address 0x4 - core index']
  #allocation1 [shape = 'u32[144,128]{1,0:T(1,128)}', space=vmem, size = 0x12000, scoped, tag = 'internal scratch']
  #allocation2 [shape = 'f32[2,128]{1,0:T(2,128)}', space=vmem, size = 0x400, scoped, tag = 'scratch operand']
  %s0 = inlined_call_operand.hbm [shape: f32[2,8192], index: 0, kind: input, shape index: {}]
  %s1 = inlined_call_operand.hbm [shape: f32[8192,128], index: 1, kind: input, shape index: {}]
  %s2 = inlined_call_operand.hbm [shape: f32[1,128], index: 2, kind: input, shape index: {}]
  %s3 = inlined_call_operand.hbm [shape: f32[2,128], index: 3, kind: output, shape index: {}]
  %s4 = sld [smem:[#allocation0]]
  $region65: #{tpu_custom_call.1} parent=0
    _
  %s6 = ssub.s32 1, %s4
  %s7 = scalar_select 0, %s6, %s4
  $region1: #{tpu_custom_call.1} parent=0
    #allocation3 [shape = 'u8[65536]{0}', space=vmem, size = 0x10000, scoped, tag = 'input window, operand 0']
    #allocation4 [shape = 's32[2]{0}', space=sflag, size = 0x8, scoped, tag = 'scoped memory for tpu_custom_call.1']
    #allocation5 [shape = 's32[2]{0}', space=sflag, size = 0x8, scoped, tag = 'scoped memory for tpu_custom_call.1']
    #allocation6 [shape = 'u8[4194304]{0}', space=vmem, size = 0x400000, scoped, tag = 'input window, operand 1']
    #allocation7 [shape = 's32[2]{0}', space=sflag, size = 0x8, scoped, tag = 'scoped memory for tpu_custom_call.1']
    #allocation8 [shape = 'u8[512]{0}', space=vmem, size = 0x400, scoped, tag = 'input window, operand 2, single buffered']
    #allocation9 [shape = 'u8[1024]{0}', space=vmem, size = 0x400, scoped, tag = 'output window, operand 0, single buffered']
    %8 = vsyncpa [#allocation4], 0
    %s9 = scalar_lea.sflag [#allocation4], 1
    %10 = vsyncpa %s9, 0
    %11 = vsyncpa [#allocation7], 0
    %s12 = scalar_lea.sflag [#allocation7], 1
    %13 = vsyncpa %s12, 0
    %14 = vsyncpa [#allocation5], 0
    loop: start=0, step=1, limit=4
    $region2: #{tpu_custom_call.1} parent=1 // loop_pre_header
      _
    $region3: #{tpu_custom_call.1} parent=1 // loop_header
      %s16 = sphi 0, %s20
      %p17 = scmp.ge.s32.totalorder %s16, 4
      %s23 = sphi 0, %s35
      %s24 = sphi 0, %s31
      %s25 = sphi 0, %s23
      %s26 = sphi 0, %s24
      %s27 = sphi 0, %s25
      %s28 = sphi 0, %s26
      %s40 = sphi 0, %s42
      %s43 = sphi 0, %s40
      %s44 = sphi 0, %s43
      %s60 = sphi 0, %s44
      %s66 = sphi 0, %s68
      %s69 = sphi 0, %s66
      %s70 = sphi 0, %s69
      %s86 = sphi 0, %s70
      %s90 = sphi 0, %s90
      %s92 = sphi 0, %s90
      %s93 = sphi 0, %s92
      %s107 = sphi 0, %s93
      %s113 = sphi 0, %s115
      %s116 = sphi 0, %s113
      %s117 = sphi 0, %s116
      %s133 = sphi 0, %s117
    $region4: #{tpu_custom_call.1} parent=1 // loop_header_branch
      %19 = sbr.rel (%p17) target = $region8
    $region5: #{tpu_custom_call.1} parent=1 // loop_body
      %s21 = ssub.s32 %s16, 1
      %s22 = ssub.s32 %s16, 2
      %s29 = sadd.s32 1, %s24
      %p30 = scmp.ge.s32.totalorder %s29, 2
      %s31 = scalar_select %p30, 0, %s29
      %s32 = sadd.s32 1, %s23
      %s33 = scalar_select %p30, %s32, %s23
      %p34 = scmp.ge.s32.totalorder %s33, 1
      %s35 = scalar_select %p34, 0, %s33
      %s36 = ssub.s32 %s23, %s35
      %s37 = ssub.s32 %s24, %s31
      %s38 = sor.u32 %s36, %s37
      %p39 = scmp.eq.s32.totalorder %s38, 0
      %s41 = sadd.s32 %s40, 1
      %s42 = scalar_select %p39, %s40, %s41
      %p45 = pneg %p39
      %p46 = scmp.eq.s32.totalorder %s16, 1
      %p47 = por %p45, %p46
      %p48 = scmp.ne.s32.totalorder %s40, %s43
      %p49 = scmp.eq.s32.totalorder %s16, 0
      %p50 = por %p48, %p49
      %p51 = scmp.ne.s32.totalorder %s40, %s43
      %p52 = scmp.eq.s32.totalorder %s21, 1
      %p53 = por %p51, %p52
      %p54 = scmp.ne.s32.totalorder %s43, %s44
      %p55 = scmp.eq.s32.totalorder %s21, 0
      %p56 = por %p54, %p55
      %p57 = scmp.ne.s32.totalorder %s43, %s44
      %p58 = scmp.eq.s32.totalorder %s22, 1
      %p59 = por %p57, %p58
      %p61 = scmp.ne.s32.totalorder %s44, %s60
      %p62 = scmp.eq.s32.totalorder %s22, 0
      %p63 = por %p61, %p62
      %s64 = ssub.s32 %s24, %s31
      %p65 = scmp.eq.s32.totalorder %s64, 0
      %s67 = sadd.s32 %s66, 1
      %s68 = scalar_select %p65, %s66, %s67
      %p71 = pneg %p65
      %p72 = scmp.eq.s32.totalorder %s16, 1
      %p73 = por %p71, %p72
      %p74 = scmp.ne.s32.totalorder %s66, %s69
      %p75 = scmp.eq.s32.totalorder %s16, 0
      %p76 = por %p74, %p75
      %p77 = scmp.ne.s32.totalorder %s66, %s69
      %p78 = scmp.eq.s32.totalorder %s21, 1
      %p79 = por %p77, %p78
      %p80 = scmp.ne.s32.totalorder %s69, %s70
      %p81 = scmp.eq.s32.totalorder %s21, 0
      %p82 = por %p80, %p81
      %p83 = scmp.ne.s32.totalorder %s69, %s70
      %p84 = scmp.eq.s32.totalorder %s22, 1
      %p85 = por %p83, %p84
      %p87 = scmp.ne.s32.totalorder %s70, %s86
      %p88 = scmp.eq.s32.totalorder %s22, 0
      %p89 = por %p87, %p88
      %s91 = sadd.s32 %s90, 1
      %p94 = scmp.eq.s32.totalorder %s16, 1
      %p95 = scmp.ne.s32.totalorder %s90, %s92
      %p96 = scmp.eq.s32.totalorder %s16, 0
      %p97 = por %p95, %p96
      %p98 = scmp.ne.s32.totalorder %s90, %s92
      %p99 = scmp.eq.s32.totalorder %s21, 1
      %p100 = por %p98, %p99
      %p101 = scmp.ne.s32.totalorder %s92, %s93
      %p102 = scmp.eq.s32.totalorder %s21, 0
      %p103 = por %p101, %p102
      %p104 = scmp.ne.s32.totalorder %s92, %s93
      %p105 = scmp.eq.s32.totalorder %s22, 1
      %p106 = por %p104, %p105
      %p108 = scmp.ne.s32.totalorder %s93, %s107
      %p109 = scmp.eq.s32.totalorder %s22, 0
      %p110 = por %p108, %p109
      %s111 = ssub.s32 %s23, %s35
      %p112 = scmp.eq.s32.totalorder %s111, 0
      %s114 = sadd.s32 %s113, 1
      %s115 = scalar_select %p112, %s113, %s114
      %p118 = pneg %p112
      %p119 = scmp.eq.s32.totalorder %s16, 1
      %p120 = por %p118, %p119
      %p121 = scmp.ne.s32.totalorder %s113, %s116
      %p122 = scmp.eq.s32.totalorder %s16, 0
      %p123 = por %p121, %p122
      %p124 = scmp.ne.s32.totalorder %s113, %s116
      %p125 = scmp.eq.s32.totalorder %s21, 1
      %p126 = por %p124, %p125
      %p127 = scmp.ne.s32.totalorder %s116, %s117
      %p128 = scmp.eq.s32.totalorder %s21, 0
      %p129 = por %p127, %p128
      %p130 = scmp.ne.s32.totalorder %s116, %s117
      %p131 = scmp.eq.s32.totalorder %s22, 1
      %p132 = por %p130, %p131
      %p134 = scmp.ne.s32.totalorder %s117, %s133
      %p135 = scmp.eq.s32.totalorder %s22, 0
      %p136 = por %p134, %p135
      %p137 = scmp.le.s32.totalorder 1, %s16
      %p138 = scmp.lt.s32.totalorder %s16, 3
      %p139 = pnand %p137, %p138
      %p140 = pneg %p139
      // Predicated region
      $region9: #{tpu_custom_call.1} parent=5 // pred_check
        _
      $region10: #{tpu_custom_call.1} parent=5 // pred_check_branch
        %142 = sbr.rel (%p139) target = $region12
      $region11: #{tpu_custom_call.1} parent=5 // pred_region
        %s143 = ssub.s32 %s16, 1
        // Predicated region
        $region13: #{tpu_custom_call.1} parent=11 // pred_check
          %p144 = pneg %p103
        $region14: #{tpu_custom_call.1} parent=11 // pred_check_branch
          %146 = sbr.rel (%p144) target = $region16
        $region15: #{tpu_custom_call.1} parent=11 // pred_region
          %s148 = ssub.s32 16, 16
          %149 = vsyncadd [#allocation7], %s148
          %s151 = sshll.u32 [#allocation8], 4
          %s152 = int_to_ptr.vmem [resolvable:$true] %s151
          %154 = dma.hbm_to_vmem [thread:$0]  %s2, 16, %s152, [#allocation7]
        $region16: #{tpu_custom_call.1} parent=11 // pred_fallthru
          _
      $region12: #{tpu_custom_call.1} parent=5 // pred_fallthru
        _
      %p155 = scmp.lt.s32.totalorder %s16, 2
      // Predicated region
      $region17: #{tpu_custom_call.1} parent=5 // pred_check
        %p156 = pneg %p155
      $region18: #{tpu_custom_call.1} parent=5 // pred_check_branch
        %158 = sbr.rel (%p156) target = $region20
      $region19: #{tpu_custom_call.1} parent=5 // pred_region
        // Predicated region
        $region21: #{tpu_custom_call.1} parent=19 // pred_check
          %p159 = pneg %p50
        $region22: #{tpu_custom_call.1} parent=19 // pred_check_branch
          %161 = sbr.rel (%p159) target = $region24
        $region23: #{tpu_custom_call.1} parent=19 // pred_region
          %s162 = sand.u32 %s40, 1
          %s163 = scalar_lea.sflag [#allocation4], %s162
          %s164 = sand.u32 %s40, 1
          %s165 = smul.addr %s164, 64
          %s166 = scalar_lea.vmem [#allocation3], %s165
          %s167 = smul.u32 32, %s24
          %s169 = ssub.s32 1024, 1024
          %170 = vsyncadd %s163, %s169
          %s171 = smul.addr %s23, 64
          %s172 = sadd.s32 %s167, %s171
          %s173 = smul.addr %s172, 32
          %s174 = scalar_lea.hbm %s0, %s173
          %s176 = sshll.u32 %s166, 4
          %s177 = int_to_ptr.vmem [resolvable:$true] %s176
          %179 = dma.hbm_to_vmem [thread:$0]  %s174, 1024, %s177, %s163
        $region24: #{tpu_custom_call.1} parent=19 // pred_fallthru
          _
        // Predicated region
        $region25: #{tpu_custom_call.1} parent=19 // pred_check
          %p180 = pneg %p76
        $region26: #{tpu_custom_call.1} parent=19 // pred_check_branch
          %182 = sbr.rel (%p180) target = $region28
        $region27: #{tpu_custom_call.1} parent=19 // pred_region
          %s183 = sand.u32 %s16, 1
          %s184 = scalar_lea.sflag [#allocation7], %s183
          %s185 = sand.u32 %s66, 1
          %s186 = smul.addr %s185, 4096
          %s187 = scalar_lea.vmem [#allocation6], %s186
          %s188 = smul.u32 512, %s24
          %s190 = ssub.s32 65536, 65536
          %191 = vsyncadd %s184, %s190
          %s192 = smul.addr %s188, 128
          %s193 = scalar_lea.hbm %s1, %s192
          %s194 = sshll.u32 %s187, 4
          %s195 = int_to_ptr.vmem [resolvable:$true] %s194
          %200 = dma.hbm_to_vmem [thread:$0]  %s193, 65536, %s195, %s184, 128, 128, 8
        $region28: #{tpu_custom_call.1} parent=19 // pred_fallthru
          _
      $region20: #{tpu_custom_call.1} parent=5 // pred_fallthru
        _
      %p201 = scmp.le.s32.totalorder 1, %s16
      %p202 = scmp.lt.s32.totalorder %s16, 3
      %p203 = pnand %p201, %p202
      %p204 = pneg %p203
      // Predicated region
      $region29: #{tpu_custom_call.1} parent=5 // pred_check
        _
      $region30: #{tpu_custom_call.1} parent=5 // pred_check_branch
        %206 = sbr.rel (%p203) target = $region32
      $region31: #{tpu_custom_call.1} parent=5 // pred_region
        %s207 = ssub.s32 %s16, 1
        %s208 = sand.u32 %s43, 1
        %s209 = scalar_lea.sflag [#allocation4], %s208
        %s210 = sand.u32 %s43, 1
        %s211 = smul.addr %s210, 64
        %s212 = scalar_lea.vmem [#allocation3], %s211
        // Predicated region
        $region33: #{tpu_custom_call.1} parent=31 // pred_check
          %p213 = pneg %p56
        $region34: #{tpu_custom_call.1} parent=31 // pred_check_branch
          %215 = sbr.rel (%p213) target = $region36
        $region35: #{tpu_custom_call.1} parent=31 // pred_region
          %216 = dma.done %s209, 1024
        $region36: #{tpu_custom_call.1} parent=31 // pred_fallthru
          _
        %s217 = sand.u32 %s21, 1
        %s218 = scalar_lea.sflag [#allocation7], %s217
        %s219 = sand.u32 %s69, 1
        %s220 = smul.addr %s219, 4096
        %s221 = scalar_lea.vmem [#allocation6], %s220
        // Predicated region
        $region37: #{tpu_custom_call.1} parent=31 // pred_check
          %p222 = pneg %p82
        $region38: #{tpu_custom_call.1} parent=31 // pred_check_branch
          %224 = sbr.rel (%p222) target = $region40
        $region39: #{tpu_custom_call.1} parent=31 // pred_region
          %225 = dma.done %s218, 65536
        $region40: #{tpu_custom_call.1} parent=31 // pred_fallthru
          _
        // Predicated region
        $region41: #{tpu_custom_call.1} parent=31 // pred_check
          %p226 = pneg %p103
        $region42: #{tpu_custom_call.1} parent=31 // pred_check_branch
          %228 = sbr.rel (%p226) target = $region44
        $region43: #{tpu_custom_call.1} parent=31 // pred_region
          %229 = dma.done [#allocation7], 16
        $region44: #{tpu_custom_call.1} parent=31 // pred_fallthru
          _
        %s230 = sand.u32 %s43, 1
        %s231 = scalar_lea.sflag [#allocation4], %s230
        %s232 = sand.u32 %s43, 1
        %s233 = smul.addr %s232, 64
        %s234 = scalar_lea.vmem [#allocation3], %s233
        %p235 = pneg %p56
        %p236 = pneg %p53
        %s237 = sand.u32 %s21, 1
        %s238 = scalar_lea.sflag [#allocation7], %s237
        %s239 = sand.u32 %s69, 1
        %s240 = smul.addr %s239, 4096
        %s241 = scalar_lea.vmem [#allocation6], %s240
        %p242 = pneg %p82
        %p243 = pneg %p79
        %p244 = pneg %p103
        %p245 = pneg %p100
        %p246 = pneg %p129
        %p247 = pneg %p126
        %s248 = smul.u32 32, %s26
        %s249 = smul.u32 512, %s26
        %p250 = scmp.eq.s32.totalorder %s26, 0
        // Predicated region
        $region45: #{tpu_custom_call.1} parent=31 // pred_check
          %p251 = pneg %p250
        $region46: #{tpu_custom_call.1} parent=31 // pred_check_branch
          %253 = sbr.rel (%p251) target = $region48
        $region47: #{tpu_custom_call.1} parent=31 // pred_region
          %254 = vst [vmem:[#allocation2] sm:$0x3] 0.0
        $region48: #{tpu_custom_call.1} parent=31 // pred_fallthru
          _
        %v255 = vld [vmem:[#allocation2] sm:$0x3]
        %v256 = vld [vmem:[%s212] sm:$0xff]
        %v257 = vld [vmem:[%s212 + $0x8] sm:$0xff]
        %v258 = vld [vmem:[%s212 + $0x10] sm:$0xff]
        %v259 = vld [vmem:[%s212 + $0x18] sm:$0xff]
        %v260 = vld [vmem:[%s212 + $0x20] sm:$0xff]
        %v261 = vld [vmem:[%s212 + $0x28] sm:$0xff]
        %v262 = vld [vmem:[%s212 + $0x30] sm:$0xff]
        %v263 = vld [vmem:[%s212 + $0x38] sm:$0xff]
        %v264 = vld [vmem:[%s221] sm:$0xff]
        %v265 = vld [vmem:[%s221 + $0x8] sm:$0xff]
        %v266 = vld [vmem:[%s221 + $0x10] sm:$0xff]
        %v267 = vld [vmem:[%s221 + $0x18] sm:$0xff]
        %v268 = vld [vmem:[%s221 + $0x20] sm:$0xff]
        %v269 = vld [vmem:[%s221 + $0x28] sm:$0xff]
        %v270 = vld [vmem:[%s221 + $0x30] sm:$0xff]
        %v271 = vld [vmem:[%s221 + $0x38] sm:$0xff]
        %v272 = vld [vmem:[%s221 + $0x40] sm:$0xff]
        %v273 = vld [vmem:[%s221 + $0x48] sm:$0xff]
        %v274 = vld [vmem:[%s221 + $0x50] sm:$0xff]
        %v275 = vld [vmem:[%s221 + $0x58] sm:$0xff]
        %v276 = vld [vmem:[%s221 + $0x60] sm:$0xff]
        %v277 = vld [vmem:[%s221 + $0x68] sm:$0xff]
        %v278 = vld [vmem:[%s221 + $0x70] sm:$0xff]
        %v279 = vld [vmem:[%s221 + $0x78] sm:$0xff]
        %v280 = vld [vmem:[%s221 + $0x80] sm:$0xff]
        %v281 = vld [vmem:[%s221 + $0x88] sm:$0xff]
        %v282 = vld [vmem:[%s221 + $0x90] sm:$0xff]
        %v283 = vld [vmem:[%s221 + $0x98] sm:$0xff]
        %v284 = vld [vmem:[%s221 + $0xa0] sm:$0xff]
        %v285 = vld [vmem:[%s221 + $0xa8] sm:$0xff]
        %v286 = vld [vmem:[%s221 + $0xb0] sm:$0xff]
        %v287 = vld [vmem:[%s221 + $0xb8] sm:$0xff]
        %v288 = vld [vmem:[%s221 + $0xc0] sm:$0xff]
        %v289 = vld [vmem:[%s221 + $0xc8] sm:$0xff]
        %v290 = vld [vmem:[%s221 + $0xd0] sm:$0xff]
        %v291 = vld [vmem:[%s221 + $0xd8] sm:$0xff]
        %v292 = vld [vmem:[%s221 + $0xe0] sm:$0xff]
        %v293 = vld [vmem:[%s221 + $0xe8] sm:$0xff]
        %v294 = vld [vmem:[%s221 + $0xf0] sm:$0xff]
        %v295 = vld [vmem:[%s221 + $0xf8] sm:$0xff]
        %v296 = vld [vmem:[%s221 + $0x100] sm:$0xff]
        %v297 = vld [vmem:[%s221 + $0x108] sm:$0xff]
        %v298 = vld [vmem:[%s221 + $0x110] sm:$0xff]
        %v299 = vld [vmem:[%s221 + $0x118] sm:$0xff]
        %v300 = vld [vmem:[%s221 + $0x120] sm:$0xff]
        %v301 = vld [vmem:[%s221 + $0x128] sm:$0xff]
        %v302 = vld [vmem:[%s221 + $0x130] sm:$0xff]
        %v303 = vld [vmem:[%s221 + $0x138] sm:$0xff]
        %v304 = vld [vmem:[%s221 + $0x140] sm:$0xff]
        %v305 = vld [vmem:[%s221 + $0x148] sm:$0xff]
        %v306 = vld [vmem:[%s221 + $0x150] sm:$0xff]
        %v307 = vld [vmem:[%s221 + $0x158] sm:$0xff]
        %v308 = vld [vmem:[%s221 + $0x160] sm:$0xff]
        %v309 = vld [vmem:[%s221 + $0x168] sm:$0xff]
        %v310 = vld [vmem:[%s221 + $0x170] sm:$0xff]
        %v311 = vld [vmem:[%s221 + $0x178] sm:$0xff]
        %v312 = vld [vmem:[%s221 + $0x180] sm:$0xff]
        %v313 = vld [vmem:[%s221 + $0x188] sm:$0xff]
        %v314 = vld [vmem:[%s221 + $0x190] sm:$0xff]
        %v315 = vld [vmem:[%s221 + $0x198] sm:$0xff]
        %v316 = vld [vmem:[%s221 + $0x1a0] sm:$0xff]
        %v317 = vld [vmem:[%s221 + $0x1a8] sm:$0xff]
        %v318 = vld [vmem:[%s221 + $0x1b0] sm:$0xff]
        %v319 = vld [vmem:[%s221 + $0x1b8] sm:$0xff]
        %v320 = vld [vmem:[%s221 + $0x1c0] sm:$0xff]
        %v321 = vld [vmem:[%s221 + $0x1c8] sm:$0xff]
        %v322 = vld [vmem:[%s221 + $0x1d0] sm:$0xff]
        %v323 = vld [vmem:[%s221 + $0x1d8] sm:$0xff]
        %v324 = vld [vmem:[%s221 + $0x1e0] sm:$0xff]
        %v325 = vld [vmem:[%s221 + $0x1e8] sm:$0xff]
        %v326 = vld [vmem:[%s221 + $0x1f0] sm:$0xff]
        %v327 = vld [vmem:[%s221 + $0x1f8] sm:$0xff]
        %v328 = vld [vmem:[%s221 + $0x200] sm:$0xff]
        %v329 = vld [vmem:[%s221 + $0x208] sm:$0xff]
        %v330 = vld [vmem:[%s221 + $0x210] sm:$0xff]
        %v331 = vld [vmem:[%s221 + $0x218] sm:$0xff]
        %v332 = vld [vmem:[%s221 + $0x220] sm:$0xff]
        %v333 = vld [vmem:[%s221 + $0x228] sm:$0xff]
        %v334 = vld [vmem:[%s221 + $0x230] sm:$0xff]
        %v335 = vld [vmem:[%s221 + $0x238] sm:$0xff]
        %v336 = vld [vmem:[%s221 + $0x240] sm:$0xff]
        %v337 = vld [vmem:[%s221 + $0x248] sm:$0xff]
        %v338 = vld [vmem:[%s221 + $0x250] sm:$0xff]
        %v339 = vld [vmem:[%s221 + $0x258] sm:$0xff]
        %v340 = vld [vmem:[%s221 + $0x260] sm:$0xff]
        %v341 = vld [vmem:[%s221 + $0x268] sm:$0xff]
        %v342 = vld [vmem:[%s221 + $0x270] sm:$0xff]
        %v343 = vld [vmem:[%s221 + $0x278] sm:$0xff]
        %v344 = vld [vmem:[%s221 + $0x280] sm:$0xff]
        %v345 = vld [vmem:[%s221 + $0x288] sm:$0xff]
        %v346 = vld [vmem:[%s221 + $0x290] sm:$0xff]
        %v347 = vld [vmem:[%s221 + $0x298] sm:$0xff]
        %v348 = vld [vmem:[%s221 + $0x2a0] sm:$0xff]
        %v349 = vld [vmem:[%s221 + $0x2a8] sm:$0xff]
        %v350 = vld [vmem:[%s221 + $0x2b0] sm:$0xff]
        %v351 = vld [vmem:[%s221 + $0x2b8] sm:$0xff]
        %v352 = vld [vmem:[%s221 + $0x2c0] sm:$0xff]
        %v353 = vld [vmem:[%s221 + $0x2c8] sm:$0xff]
        %v354 = vld [vmem:[%s221 + $0x2d0] sm:$0xff]
        %v355 = vld [vmem:[%s221 + $0x2d8] sm:$0xff]
        %v356 = vld [vmem:[%s221 + $0x2e0] sm:$0xff]
        %v357 = vld [vmem:[%s221 + $0x2e8] sm:$0xff]
        %v358 = vld [vmem:[%s221 + $0x2f0] sm:$0xff]
        %v359 = vld [vmem:[%s221 + $0x2f8] sm:$0xff]
        %v360 = vld [vmem:[%s221 + $0x300] sm:$0xff]
        %v361 = vld [vmem:[%s221 + $0x308] sm:$0xff]
        %v362 = vld [vmem:[%s221 + $0x310] sm:$0xff]
        %v363 = vld [vmem:[%s221 + $0x318] sm:$0xff]
        %v364 = vld [vmem:[%s221 + $0x320] sm:$0xff]
        %v365 = vld [vmem:[%s221 + $0x328] sm:$0xff]
        %v366 = vld [vmem:[%s221 + $0x330] sm:$0xff]
        %v367 = vld [vmem:[%s221 + $0x338] sm:$0xff]
        %v368 = vld [vmem:[%s221 + $0x340] sm:$0xff]
        %v369 = vld [vmem:[%s221 + $0x348] sm:$0xff]
        %v370 = vld [vmem:[%s221 + $0x350] sm:$0xff]
        %v371 = vld [vmem:[%s221 + $0x358] sm:$0xff]
        %v372 = vld [vmem:[%s221 + $0x360] sm:$0xff]
        %v373 = vld [vmem:[%s221 + $0x368] sm:$0xff]
        %v374 = vld [vmem:[%s221 + $0x370] sm:$0xff]
        %v375 = vld [vmem:[%s221 + $0x378] sm:$0xff]
        %v376 = vld [vmem:[%s221 + $0x380] sm:$0xff]
        %v377 = vld [vmem:[%s221 + $0x388] sm:$0xff]
        %v378 = vld [vmem:[%s221 + $0x390] sm:$0xff]
        %v379 = vld [vmem:[%s221 + $0x398] sm:$0xff]
        %v380 = vld [vmem:[%s221 + $0x3a0] sm:$0xff]
        %v381 = vld [vmem:[%s221 + $0x3a8] sm:$0xff]
        %v382 = vld [vmem:[%s221 + $0x3b0] sm:$0xff]
        %v383 = vld [vmem:[%s221 + $0x3b8] sm:$0xff]
        %v384 = vld [vmem:[%s221 + $0x3c0] sm:$0xff]
        %v385 = vld [vmem:[%s221 + $0x3c8] sm:$0xff]
        %v386 = vld [vmem:[%s221 + $0x3d0] sm:$0xff]
        %v387 = vld [vmem:[%s221 + $0x3d8] sm:$0xff]
        %v388 = vld [vmem:[%s221 + $0x3e0] sm:$0xff]
        %v389 = vld [vmem:[%s221 + $0x3e8] sm:$0xff]
        %v390 = vld [vmem:[%s221 + $0x3f0] sm:$0xff]
        %v391 = vld [vmem:[%s221 + $0x3f8] sm:$0xff]
        %v392 = vld [vmem:[%s221 + $0x400] sm:$0xff]
        %v393 = vld [vmem:[%s221 + $0x408] sm:$0xff]
        %v394 = vld [vmem:[%s221 + $0x410] sm:$0xff]
        %v395 = vld [vmem:[%s221 + $0x418] sm:$0xff]
        %v396 = vld [vmem:[%s221 + $0x420] sm:$0xff]
        %v397 = vld [vmem:[%s221 + $0x428] sm:$0xff]
        %v398 = vld [vmem:[%s221 + $0x430] sm:$0xff]
        %v399 = vld [vmem:[%s221 + $0x438] sm:$0xff]
        %v400 = vld [vmem:[%s221 + $0x440] sm:$0xff]
        %v401 = vld [vmem:[%s221 + $0x448] sm:$0xff]
        %v402 = vld [vmem:[%s221 + $0x450] sm:$0xff]
        %v403 = vld [vmem:[%s221 + $0x458] sm:$0xff]
        %v404 = vld [vmem:[%s221 + $0x460] sm:$0xff]
        %v405 = vld [vmem:[%s221 + $0x468] sm:$0xff]
        %v406 = vld [vmem:[%s221 + $0x470] sm:$0xff]
        %v407 = vld [vmem:[%s221 + $0x478] sm:$0xff]
        %v408 = vld [vmem:[%s221 + $0x480] sm:$0xff]
        %v409 = vld [vmem:[%s221 + $0x488] sm:$0xff]
        %v410 = vld [vmem:[%s221 + $0x490] sm:$0xff]
        %v411 = vld [vmem:[%s221 + $0x498] sm:$0xff]
        %v412 = vld [vmem:[%s221 + $0x4a0] sm:$0xff]
        %v413 = vld [vmem:[%s221 + $0x4a8] sm:$0xff]
        %v414 = vld [vmem:[%s221 + $0x4b0] sm:$0xff]
        %v415 = vld [vmem:[%s221 + $0x4b8] sm:$0xff]
        %v416 = vld [vmem:[%s221 + $0x4c0] sm:$0xff]
        %v417 = vld [vmem:[%s221 + $0x4c8] sm:$0xff]
        %v418 = vld [vmem:[%s221 + $0x4d0] sm:$0xff]
        %v419 = vld [vmem:[%s221 + $0x4d8] sm:$0xff]
        %v420 = vld [vmem:[%s221 + $0x4e0] sm:$0xff]
        %v421 = vld [vmem:[%s221 + $0x4e8] sm:$0xff]
        %v422 = vld [vmem:[%s221 + $0x4f0] sm:$0xff]
        %v423 = vld [vmem:[%s221 + $0x4f8] sm:$0xff]
        %v424 = vld [vmem:[%s221 + $0x500] sm:$0xff]
        %v425 = vld [vmem:[%s221 + $0x508] sm:$0xff]
        %v426 = vld [vmem:[%s221 + $0x510] sm:$0xff]
        %v427 = vld [vmem:[%s221 + $0x518] sm:$0xff]
        %v428 = vld [vmem:[%s221 + $0x520] sm:$0xff]
        %v429 = vld [vmem:[%s221 + $0x528] sm:$0xff]
        %v430 = vld [vmem:[%s221 + $0x530] sm:$0xff]
        %v431 = vld [vmem:[%s221 + $0x538] sm:$0xff]
        %v432 = vld [vmem:[%s221 + $0x540] sm:$0xff]
        %v433 = vld [vmem:[%s221 + $0x548] sm:$0xff]
        %v434 = vld [vmem:[%s221 + $0x550] sm:$0xff]
        %v435 = vld [vmem:[%s221 + $0x558] sm:$0xff]
        %v436 = vld [vmem:[%s221 + $0x560] sm:$0xff]
        %v437 = vld [vmem:[%s221 + $0x568] sm:$0xff]
        %v438 = vld [vmem:[%s221 + $0x570] sm:$0xff]
        %v439 = vld [vmem:[%s221 + $0x578] sm:$0xff]
        %v440 = vld [vmem:[%s221 + $0x580] sm:$0xff]
        %v441 = vld [vmem:[%s221 + $0x588] sm:$0xff]
        %v442 = vld [vmem:[%s221 + $0x590] sm:$0xff]
        %v443 = vld [vmem:[%s221 + $0x598] sm:$0xff]
        %v444 = vld [vmem:[%s221 + $0x5a0] sm:$0xff]
        %v445 = vld [vmem:[%s221 + $0x5a8] sm:$0xff]
        %v446 = vld [vmem:[%s221 + $0x5b0] sm:$0xff]
        %v447 = vld [vmem:[%s221 + $0x5b8] sm:$0xff]
        %v448 = vld [vmem:[%s221 + $0x5c0] sm:$0xff]
        %v449 = vld [vmem:[%s221 + $0x5c8] sm:$0xff]
        %v450 = vld [vmem:[%s221 + $0x5d0] sm:$0xff]
        %v451 = vld [vmem:[%s221 + $0x5d8] sm:$0xff]
        %v452 = vld [vmem:[%s221 + $0x5e0] sm:$0xff]
        %v453 = vld [vmem:[%s221 + $0x5e8] sm:$0xff]
        %v454 = vld [vmem:[%s221 + $0x5f0] sm:$0xff]
        %v455 = vld [vmem:[%s221 + $0x5f8] sm:$0xff]
        %v456 = vld [vmem:[%s221 + $0x600] sm:$0xff]
        %v457 = vld [vmem:[%s221 + $0x608] sm:$0xff]
        %v458 = vld [vmem:[%s221 + $0x610] sm:$0xff]
        %v459 = vld [vmem:[%s221 + $0x618] sm:$0xff]
        %v460 = vld [vmem:[%s221 + $0x620] sm:$0xff]
        %v461 = vld [vmem:[%s221 + $0x628] sm:$0xff]
        %v462 = vld [vmem:[%s221 + $0x630] sm:$0xff]
        %v463 = vld [vmem:[%s221 + $0x638] sm:$0xff]
        %v464 = vld [vmem:[%s221 + $0x640] sm:$0xff]
        %v465 = vld [vmem:[%s221 + $0x648] sm:$0xff]
        %v466 = vld [vmem:[%s221 + $0x650] sm:$0xff]
        %v467 = vld [vmem:[%s221 + $0x658] sm:$0xff]
        %v468 = vld [vmem:[%s221 + $0x660] sm:$0xff]
        %v469 = vld [vmem:[%s221 + $0x668] sm:$0xff]
        %v470 = vld [vmem:[%s221 + $0x670] sm:$0xff]
        %v471 = vld [vmem:[%s221 + $0x678] sm:$0xff]
        %v472 = vld [vmem:[%s221 + $0x680] sm:$0xff]
        %v473 = vld [vmem:[%s221 + $0x688] sm:$0xff]
        %v474 = vld [vmem:[%s221 + $0x690] sm:$0xff]
        %v475 = vld [vmem:[%s221 + $0x698] sm:$0xff]
        %v476 = vld [vmem:[%s221 + $0x6a0] sm:$0xff]
        %v477 = vld [vmem:[%s221 + $0x6a8] sm:$0xff]
        %v478 = vld [vmem:[%s221 + $0x6b0] sm:$0xff]
        %v479 = vld [vmem:[%s221 + $0x6b8] sm:$0xff]
        %v480 = vld [vmem:[%s221 + $0x6c0] sm:$0xff]
        %v481 = vld [vmem:[%s221 + $0x6c8] sm:$0xff]
        %v482 = vld [vmem:[%s221 + $0x6d0] sm:$0xff]
        %v483 = vld [vmem:[%s221 + $0x6d8] sm:$0xff]
        %v484 = vld [vmem:[%s221 + $0x6e0] sm:$0xff]
        %v485 = vld [vmem:[%s221 + $0x6e8] sm:$0xff]
        %v486 = vld [vmem:[%s221 + $0x6f0] sm:$0xff]
        %v487 = vld [vmem:[%s221 + $0x6f8] sm:$0xff]
        %v488 = vld [vmem:[%s221 + $0x700] sm:$0xff]
        %v489 = vld [vmem:[%s221 + $0x708] sm:$0xff]
        %v490 = vld [vmem:[%s221 + $0x710] sm:$0xff]
        %v491 = vld [vmem:[%s221 + $0x718] sm:$0xff]
        %v492 = vld [vmem:[%s221 + $0x720] sm:$0xff]
        %v493 = vld [vmem:[%s221 + $0x728] sm:$0xff]
        %v494 = vld [vmem:[%s221 + $0x730] sm:$0xff]
        %v495 = vld [vmem:[%s221 + $0x738] sm:$0xff]
        %v496 = vld [vmem:[%s221 + $0x740] sm:$0xff]
        %v497 = vld [vmem:[%s221 + $0x748] sm:$0xff]
        %v498 = vld [vmem:[%s221 + $0x750] sm:$0xff]
        %v499 = vld [vmem:[%s221 + $0x758] sm:$0xff]
        %v500 = vld [vmem:[%s221 + $0x760] sm:$0xff]
        %v501 = vld [vmem:[%s221 + $0x768] sm:$0xff]
        %v502 = vld [vmem:[%s221 + $0x770] sm:$0xff]
        %v503 = vld [vmem:[%s221 + $0x778] sm:$0xff]
        %v504 = vld [vmem:[%s221 + $0x780] sm:$0xff]
        %v505 = vld [vmem:[%s221 + $0x788] sm:$0xff]
        %v506 = vld [vmem:[%s221 + $0x790] sm:$0xff]
        %v507 = vld [vmem:[%s221 + $0x798] sm:$0xff]
        %v508 = vld [vmem:[%s221 + $0x7a0] sm:$0xff]
        %v509 = vld [vmem:[%s221 + $0x7a8] sm:$0xff]
        %v510 = vld [vmem:[%s221 + $0x7b0] sm:$0xff]
        %v511 = vld [vmem:[%s221 + $0x7b8] sm:$0xff]
        %v512 = vld [vmem:[%s221 + $0x7c0] sm:$0xff]
        %v513 = vld [vmem:[%s221 + $0x7c8] sm:$0xff]
        %v514 = vld [vmem:[%s221 + $0x7d0] sm:$0xff]
        %v515 = vld [vmem:[%s221 + $0x7d8] sm:$0xff]
        %v516 = vld [vmem:[%s221 + $0x7e0] sm:$0xff]
        %v517 = vld [vmem:[%s221 + $0x7e8] sm:$0xff]
        %v518 = vld [vmem:[%s221 + $0x7f0] sm:$0xff]
        %v519 = vld [vmem:[%s221 + $0x7f8] sm:$0xff]
        %v520 = vld [vmem:[%s221 + $0x800] sm:$0xff]
        %v521 = vld [vmem:[%s221 + $0x808] sm:$0xff]
        %v522 = vld [vmem:[%s221 + $0x810] sm:$0xff]
        %v523 = vld [vmem:[%s221 + $0x818] sm:$0xff]
        %v524 = vld [vmem:[%s221 + $0x820] sm:$0xff]
        %v525 = vld [vmem:[%s221 + $0x828] sm:$0xff]
        %v526 = vld [vmem:[%s221 + $0x830] sm:$0xff]
        %v527 = vld [vmem:[%s221 + $0x838] sm:$0xff]
        %v528 = vld [vmem:[%s221 + $0x840] sm:$0xff]
        %v529 = vld [vmem:[%s221 + $0x848] sm:$0xff]
        %v530 = vld [vmem:[%s221 + $0x850] sm:$0xff]
        %v531 = vld [vmem:[%s221 + $0x858] sm:$0xff]
        %v532 = vld [vmem:[%s221 + $0x860] sm:$0xff]
        %v533 = vld [vmem:[%s221 + $0x868] sm:$0xff]
        %v534 = vld [vmem:[%s221 + $0x870] sm:$0xff]
        %v535 = vld [vmem:[%s221 + $0x878] sm:$0xff]
        %v536 = vld [vmem:[%s221 + $0x880] sm:$0xff]
        %v537 = vld [vmem:[%s221 + $0x888] sm:$0xff]
        %v538 = vld [vmem:[%s221 + $0x890] sm:$0xff]
        %v539 = vld [vmem:[%s221 + $0x898] sm:$0xff]
        %v540 = vld [vmem:[%s221 + $0x8a0] sm:$0xff]
        %v541 = vld [vmem:[%s221 + $0x8a8] sm:$0xff]
        %v542 = vld [vmem:[%s221 + $0x8b0] sm:$0xff]
        %v543 = vld [vmem:[%s221 + $0x8b8] sm:$0xff]
        %v544 = vld [vmem:[%s221 + $0x8c0] sm:$0xff]
        %v545 = vld [vmem:[%s221 + $0x8c8] sm:$0xff]
        %v546 = vld [vmem:[%s221 + $0x8d0] sm:$0xff]
        %v547 = vld [vmem:[%s221 + $0x8d8] sm:$0xff]
        %v548 = vld [vmem:[%s221 + $0x8e0] sm:$0xff]
        %v549 = vld [vmem:[%s221 + $0x8e8] sm:$0xff]
        %v550 = vld [vmem:[%s221 + $0x8f0] sm:$0xff]
        %v551 = vld [vmem:[%s221 + $0x8f8] sm:$0xff]
        %v552 = vld [vmem:[%s221 + $0x900] sm:$0xff]
        %v553 = vld [vmem:[%s221 + $0x908] sm:$0xff]
        %v554 = vld [vmem:[%s221 + $0x910] sm:$0xff]
        %v555 = vld [vmem:[%s221 + $0x918] sm:$0xff]
        %v556 = vld [vmem:[%s221 + $0x920] sm:$0xff]
        %v557 = vld [vmem:[%s221 + $0x928] sm:$0xff]
        %v558 = vld [vmem:[%s221 + $0x930] sm:$0xff]
        %v559 = vld [vmem:[%s221 + $0x938] sm:$0xff]
        %v560 = vld [vmem:[%s221 + $0x940] sm:$0xff]
        %v561 = vld [vmem:[%s221 + $0x948] sm:$0xff]
        %v562 = vld [vmem:[%s221 + $0x950] sm:$0xff]
        %v563 = vld [vmem:[%s221 + $0x958] sm:$0xff]
        %v564 = vld [vmem:[%s221 + $0x960] sm:$0xff]
        %v565 = vld [vmem:[%s221 + $0x968] sm:$0xff]
        %v566 = vld [vmem:[%s221 + $0x970] sm:$0xff]
        %v567 = vld [vmem:[%s221 + $0x978] sm:$0xff]
        %v568 = vld [vmem:[%s221 + $0x980] sm:$0xff]
        %v569 = vld [vmem:[%s221 + $0x988] sm:$0xff]
        %v570 = vld [vmem:[%s221 + $0x990] sm:$0xff]
        %v571 = vld [vmem:[%s221 + $0x998] sm:$0xff]
        %v572 = vld [vmem:[%s221 + $0x9a0] sm:$0xff]
        %v573 = vld [vmem:[%s221 + $0x9a8] sm:$0xff]
        %v574 = vld [vmem:[%s221 + $0x9b0] sm:$0xff]
        %v575 = vld [vmem:[%s221 + $0x9b8] sm:$0xff]
        %v576 = vld [vmem:[%s221 + $0x9c0] sm:$0xff]
        %v577 = vld [vmem:[%s221 + $0x9c8] sm:$0xff]
        %v578 = vld [vmem:[%s221 + $0x9d0] sm:$0xff]
        %v579 = vld [vmem:[%s221 + $0x9d8] sm:$0xff]
        %v580 = vld [vmem:[%s221 + $0x9e0] sm:$0xff]
        %v581 = vld [vmem:[%s221 + $0x9e8] sm:$0xff]
        %v582 = vld [vmem:[%s221 + $0x9f0] sm:$0xff]
        %v583 = vld [vmem:[%s221 + $0x9f8] sm:$0xff]
        %v584 = vld [vmem:[%s221 + $0xa00] sm:$0xff]
        %v585 = vld [vmem:[%s221 + $0xa08] sm:$0xff]
        %v586 = vld [vmem:[%s221 + $0xa10] sm:$0xff]
        %v587 = vld [vmem:[%s221 + $0xa18] sm:$0xff]
        %v588 = vld [vmem:[%s221 + $0xa20] sm:$0xff]
        %v589 = vld [vmem:[%s221 + $0xa28] sm:$0xff]
        %v590 = vld [vmem:[%s221 + $0xa30] sm:$0xff]
        %v591 = vld [vmem:[%s221 + $0xa38] sm:$0xff]
        %v592 = vld [vmem:[%s221 + $0xa40] sm:$0xff]
        %v593 = vld [vmem:[%s221 + $0xa48] sm:$0xff]
        %v594 = vld [vmem:[%s221 + $0xa50] sm:$0xff]
        %v595 = vld [vmem:[%s221 + $0xa58] sm:$0xff]
        %v596 = vld [vmem:[%s221 + $0xa60] sm:$0xff]
        %v597 = vld [vmem:[%s221 + $0xa68] sm:$0xff]
        %v598 = vld [vmem:[%s221 + $0xa70] sm:$0xff]
        %v599 = vld [vmem:[%s221 + $0xa78] sm:$0xff]
        %v600 = vld [vmem:[%s221 + $0xa80] sm:$0xff]
        %v601 = vld [vmem:[%s221 + $0xa88] sm:$0xff]
        %v602 = vld [vmem:[%s221 + $0xa90] sm:$0xff]
        %v603 = vld [vmem:[%s221 + $0xa98] sm:$0xff]
        %v604 = vld [vmem:[%s221 + $0xaa0] sm:$0xff]
        %v605 = vld [vmem:[%s221 + $0xaa8] sm:$0xff]
        %v606 = vld [vmem:[%s221 + $0xab0] sm:$0xff]
        %v607 = vld [vmem:[%s221 + $0xab8] sm:$0xff]
        %v608 = vld [vmem:[%s221 + $0xac0] sm:$0xff]
        %v609 = vld [vmem:[%s221 + $0xac8] sm:$0xff]
        %v610 = vld [vmem:[%s221 + $0xad0] sm:$0xff]
        %v611 = vld [vmem:[%s221 + $0xad8] sm:$0xff]
        %v612 = vld [vmem:[%s221 + $0xae0] sm:$0xff]
        %v613 = vld [vmem:[%s221 + $0xae8] sm:$0xff]
        %v614 = vld [vmem:[%s221 + $0xaf0] sm:$0xff]
        %v615 = vld [vmem:[%s221 + $0xaf8] sm:$0xff]
        %v616 = vld [vmem:[%s221 + $0xb00] sm:$0xff]
        %v617 = vld [vmem:[%s221 + $0xb08] sm:$0xff]
        %v618 = vld [vmem:[%s221 + $0xb10] sm:$0xff]
        %v619 = vld [vmem:[%s221 + $0xb18] sm:$0xff]
        %v620 = vld [vmem:[%s221 + $0xb20] sm:$0xff]
        %v621 = vld [vmem:[%s221 + $0xb28] sm:$0xff]
        %v622 = vld [vmem:[%s221 + $0xb30] sm:$0xff]
        %v623 = vld [vmem:[%s221 + $0xb38] sm:$0xff]
        %v624 = vld [vmem:[%s221 + $0xb40] sm:$0xff]
        %v625 = vld [vmem:[%s221 + $0xb48] sm:$0xff]
        %v626 = vld [vmem:[%s221 + $0xb50] sm:$0xff]
        %v627 = vld [vmem:[%s221 + $0xb58] sm:$0xff]
        %v628 = vld [vmem:[%s221 + $0xb60] sm:$0xff]
        %v629 = vld [vmem:[%s221 + $0xb68] sm:$0xff]
        %v630 = vld [vmem:[%s221 + $0xb70] sm:$0xff]
        %v631 = vld [vmem:[%s221 + $0xb78] sm:$0xff]
        %v632 = vld [vmem:[%s221 + $0xb80] sm:$0xff]
        %v633 = vld [vmem:[%s221 + $0xb88] sm:$0xff]
        %v634 = vld [vmem:[%s221 + $0xb90] sm:$0xff]
        %v635 = vld [vmem:[%s221 + $0xb98] sm:$0xff]
        %v636 = vld [vmem:[%s221 + $0xba0] sm:$0xff]
        %v637 = vld [vmem:[%s221 + $0xba8] sm:$0xff]
        %v638 = vld [vmem:[%s221 + $0xbb0] sm:$0xff]
        %v639 = vld [vmem:[%s221 + $0xbb8] sm:$0xff]
        %v640 = vld [vmem:[%s221 + $0xbc0] sm:$0xff]
        %v641 = vld [vmem:[%s221 + $0xbc8] sm:$0xff]
        %v642 = vld [vmem:[%s221 + $0xbd0] sm:$0xff]
        %v643 = vld [vmem:[%s221 + $0xbd8] sm:$0xff]
        %v644 = vld [vmem:[%s221 + $0xbe0] sm:$0xff]
        %v645 = vld [vmem:[%s221 + $0xbe8] sm:$0xff]
        %v646 = vld [vmem:[%s221 + $0xbf0] sm:$0xff]
        %v647 = vld [vmem:[%s221 + $0xbf8] sm:$0xff]
        %v648 = vld [vmem:[%s221 + $0xc00] sm:$0xff]
        %v649 = vld [vmem:[%s221 + $0xc08] sm:$0xff]
        %v650 = vld [vmem:[%s221 + $0xc10] sm:$0xff]
        %v651 = vld [vmem:[%s221 + $0xc18] sm:$0xff]
        %v652 = vld [vmem:[%s221 + $0xc20] sm:$0xff]
        %v653 = vld [vmem:[%s221 + $0xc28] sm:$0xff]
        %v654 = vld [vmem:[%s221 + $0xc30] sm:$0xff]
        %v655 = vld [vmem:[%s221 + $0xc38] sm:$0xff]
        %v656 = vld [vmem:[%s221 + $0xc40] sm:$0xff]
        %v657 = vld [vmem:[%s221 + $0xc48] sm:$0xff]
        %v658 = vld [vmem:[%s221 + $0xc50] sm:$0xff]
        %v659 = vld [vmem:[%s221 + $0xc58] sm:$0xff]
        %v660 = vld [vmem:[%s221 + $0xc60] sm:$0xff]
        %v661 = vld [vmem:[%s221 + $0xc68] sm:$0xff]
        %v662 = vld [vmem:[%s221 + $0xc70] sm:$0xff]
        %v663 = vld [vmem:[%s221 + $0xc78] sm:$0xff]
        %v664 = vld [vmem:[%s221 + $0xc80] sm:$0xff]
        %v665 = vld [vmem:[%s221 + $0xc88] sm:$0xff]
        %v666 = vld [vmem:[%s221 + $0xc90] sm:$0xff]
        %v667 = vld [vmem:[%s221 + $0xc98] sm:$0xff]
        %v668 = vld [vmem:[%s221 + $0xca0] sm:$0xff]
        %v669 = vld [vmem:[%s221 + $0xca8] sm:$0xff]
        %v670 = vld [vmem:[%s221 + $0xcb0] sm:$0xff]
        %v671 = vld [vmem:[%s221 + $0xcb8] sm:$0xff]
        %v672 = vld [vmem:[%s221 + $0xcc0] sm:$0xff]
        %v673 = vld [vmem:[%s221 + $0xcc8] sm:$0xff]
        %v674 = vld [vmem:[%s221 + $0xcd0] sm:$0xff]
        %v675 = vld [vmem:[%s221 + $0xcd8] sm:$0xff]
        %v676 = vld [vmem:[%s221 + $0xce0] sm:$0xff]
        %v677 = vld [vmem:[%s221 + $0xce8] sm:$0xff]
        %v678 = vld [vmem:[%s221 + $0xcf0] sm:$0xff]
        %v679 = vld [vmem:[%s221 + $0xcf8] sm:$0xff]
        %v680 = vld [vmem:[%s221 + $0xd00] sm:$0xff]
        %v681 = vld [vmem:[%s221 + $0xd08] sm:$0xff]
        %v682 = vld [vmem:[%s221 + $0xd10] sm:$0xff]
        %v683 = vld [vmem:[%s221 + $0xd18] sm:$0xff]
        %v684 = vld [vmem:[%s221 + $0xd20] sm:$0xff]
        %v685 = vld [vmem:[%s221 + $0xd28] sm:$0xff]
        %v686 = vld [vmem:[%s221 + $0xd30] sm:$0xff]
        %v687 = vld [vmem:[%s221 + $0xd38] sm:$0xff]
        %v688 = vld [vmem:[%s221 + $0xd40] sm:$0xff]
        %v689 = vld [vmem:[%s221 + $0xd48] sm:$0xff]
        %v690 = vld [vmem:[%s221 + $0xd50] sm:$0xff]
        %v691 = vld [vmem:[%s221 + $0xd58] sm:$0xff]
        %v692 = vld [vmem:[%s221 + $0xd60] sm:$0xff]
        %v693 = vld [vmem:[%s221 + $0xd68] sm:$0xff]
        %v694 = vld [vmem:[%s221 + $0xd70] sm:$0xff]
        %v695 = vld [vmem:[%s221 + $0xd78] sm:$0xff]
        %v696 = vld [vmem:[%s221 + $0xd80] sm:$0xff]
        %v697 = vld [vmem:[%s221 + $0xd88] sm:$0xff]
        %v698 = vld [vmem:[%s221 + $0xd90] sm:$0xff]
        %v699 = vld [vmem:[%s221 + $0xd98] sm:$0xff]
        %v700 = vld [vmem:[%s221 + $0xda0] sm:$0xff]
        %v701 = vld [vmem:[%s221 + $0xda8] sm:$0xff]
        %v702 = vld [vmem:[%s221 + $0xdb0] sm:$0xff]
        %v703 = vld [vmem:[%s221 + $0xdb8] sm:$0xff]
        %v704 = vld [vmem:[%s221 + $0xdc0] sm:$0xff]
        %v705 = vld [vmem:[%s221 + $0xdc8] sm:$0xff]
        %v706 = vld [vmem:[%s221 + $0xdd0] sm:$0xff]
        %v707 = vld [vmem:[%s221 + $0xdd8] sm:$0xff]
        %v708 = vld [vmem:[%s221 + $0xde0] sm:$0xff]
        %v709 = vld [vmem:[%s221 + $0xde8] sm:$0xff]
        %v710 = vld [vmem:[%s221 + $0xdf0] sm:$0xff]
        %v711 = vld [vmem:[%s221 + $0xdf8] sm:$0xff]
        %v712 = vld [vmem:[%s221 + $0xe00] sm:$0xff]
        %v713 = vld [vmem:[%s221 + $0xe08] sm:$0xff]
        %v714 = vld [vmem:[%s221 + $0xe10] sm:$0xff]
        %v715 = vld [vmem:[%s221 + $0xe18] sm:$0xff]
        %v716 = vld [vmem:[%s221 + $0xe20] sm:$0xff]
        %v717 = vld [vmem:[%s221 + $0xe28] sm:$0xff]
        %v718 = vld [vmem:[%s221 + $0xe30] sm:$0xff]
        %v719 = vld [vmem:[%s221 + $0xe38] sm:$0xff]
        %v720 = vld [vmem:[%s221 + $0xe40] sm:$0xff]
        %v721 = vld [vmem:[%s221 + $0xe48] sm:$0xff]
        %v722 = vld [vmem:[%s221 + $0xe50] sm:$0xff]
        %v723 = vld [vmem:[%s221 + $0xe58] sm:$0xff]
        %v724 = vld [vmem:[%s221 + $0xe60] sm:$0xff]
        %v725 = vld [vmem:[%s221 + $0xe68] sm:$0xff]
        %v726 = vld [vmem:[%s221 + $0xe70] sm:$0xff]
        %v727 = vld [vmem:[%s221 + $0xe78] sm:$0xff]
        %v728 = vld [vmem:[%s221 + $0xe80] sm:$0xff]
        %v729 = vld [vmem:[%s221 + $0xe88] sm:$0xff]
        %v730 = vld [vmem:[%s221 + $0xe90] sm:$0xff]
        %v731 = vld [vmem:[%s221 + $0xe98] sm:$0xff]
        %v732 = vld [vmem:[%s221 + $0xea0] sm:$0xff]
        %v733 = vld [vmem:[%s221 + $0xea8] sm:$0xff]
        %v734 = vld [vmem:[%s221 + $0xeb0] sm:$0xff]
        %v735 = vld [vmem:[%s221 + $0xeb8] sm:$0xff]
        %v736 = vld [vmem:[%s221 + $0xec0] sm:$0xff]
        %v737 = vld [vmem:[%s221 + $0xec8] sm:$0xff]
        %v738 = vld [vmem:[%s221 + $0xed0] sm:$0xff]
        %v739 = vld [vmem:[%s221 + $0xed8] sm:$0xff]
        %v740 = vld [vmem:[%s221 + $0xee0] sm:$0xff]
        %v741 = vld [vmem:[%s221 + $0xee8] sm:$0xff]
        %v742 = vld [vmem:[%s221 + $0xef0] sm:$0xff]
        %v743 = vld [vmem:[%s221 + $0xef8] sm:$0xff]
        %v744 = vld [vmem:[%s221 + $0xf00] sm:$0xff]
        %v745 = vld [vmem:[%s221 + $0xf08] sm:$0xff]
        %v746 = vld [vmem:[%s221 + $0xf10] sm:$0xff]
        %v747 = vld [vmem:[%s221 + $0xf18] sm:$0xff]
        %v748 = vld [vmem:[%s221 + $0xf20] sm:$0xff]
        %v749 = vld [vmem:[%s221 + $0xf28] sm:$0xff]
        %v750 = vld [vmem:[%s221 + $0xf30] sm:$0xff]
        %v751 = vld [vmem:[%s221 + $0xf38] sm:$0xff]
        %v752 = vld [vmem:[%s221 + $0xf40] sm:$0xff]
        %v753 = vld [vmem:[%s221 + $0xf48] sm:$0xff]
        %v754 = vld [vmem:[%s221 + $0xf50] sm:$0xff]
        %v755 = vld [vmem:[%s221 + $0xf58] sm:$0xff]
        %v756 = vld [vmem:[%s221 + $0xf60] sm:$0xff]
        %v757 = vld [vmem:[%s221 + $0xf68] sm:$0xff]
        %v758 = vld [vmem:[%s221 + $0xf70] sm:$0xff]
        %v759 = vld [vmem:[%s221 + $0xf78] sm:$0xff]
        %v760 = vld [vmem:[%s221 + $0xf80] sm:$0xff]
        %v761 = vld [vmem:[%s221 + $0xf88] sm:$0xff]
        %v762 = vld [vmem:[%s221 + $0xf90] sm:$0xff]
        %v763 = vld [vmem:[%s221 + $0xf98] sm:$0xff]
        %v764 = vld [vmem:[%s221 + $0xfa0] sm:$0xff]
        %v765 = vld [vmem:[%s221 + $0xfa8] sm:$0xff]
        %v766 = vld [vmem:[%s221 + $0xfb0] sm:$0xff]
        %v767 = vld [vmem:[%s221 + $0xfb8] sm:$0xff]
        %v768 = vld [vmem:[%s221 + $0xfc0] sm:$0xff]
        %v769 = vld [vmem:[%s221 + $0xfc8] sm:$0xff]
        %v770 = vld [vmem:[%s221 + $0xfd0] sm:$0xff]
        %v771 = vld [vmem:[%s221 + $0xfd8] sm:$0xff]
        %v772 = vld [vmem:[%s221 + $0xfe0] sm:$0xff]
        %v773 = vld [vmem:[%s221 + $0xfe8] sm:$0xff]
        %v774 = vld [vmem:[%s221 + $0xff0] sm:$0xff]
        %v775 = vld [vmem:[%s221 + $0xff8] sm:$0xff]
        %v784 = vcombine.high %v256, %v256
        %v786 = vunpack.c.l.s4 1983009808
        %v787 = vunpack.c.0.s8 %v786
        %v788 = vlaneseq
        %v789 = vshrl.u32 %v788, 7
        %v790 = vsub.s32 %v787, %v789
        %v791 = vrot.slane %v256, %v790
        %v793 = vunpack.c.l.s4 1983009808
        %v794 = vunpack.c.0.s8 %v793
        %v795 = vlaneseq
        %v796 = vshrl.u32 %v795, 7
        %v797 = vsub.s32 %v794, %v796
        %v798 = vrot.slane %v784, %v797
        %v799 = vcombine.high %v791, %v791
        %v800 = vcombine.high %v798, %v798
        %v801 = vcombine.high %v257, %v257
        %v803 = vunpack.c.l.s4 1983009808
        %v804 = vunpack.c.0.s8 %v803
        %v805 = vlaneseq
        %v806 = vshrl.u32 %v805, 7
        %v807 = vsub.s32 %v804, %v806
        %v808 = vrot.slane %v257, %v807
        %v810 = vunpack.c.l.s4 1983009808
        %v811 = vunpack.c.0.s8 %v810
        %v812 = vlaneseq
        %v813 = vshrl.u32 %v812, 7
        %v814 = vsub.s32 %v811, %v813
        %v815 = vrot.slane %v801, %v814
        %v816 = vcombine.high %v808, %v808
        %v817 = vcombine.high %v815, %v815
        %v818 = vcombine.high %v258, %v258
        %v820 = vunpack.c.l.s4 1983009808
        %v821 = vunpack.c.0.s8 %v820
        %v822 = vlaneseq
        %v823 = vshrl.u32 %v822, 7
        %v824 = vsub.s32 %v821, %v823
        %v825 = vrot.slane %v258, %v824
        %v827 = vunpack.c.l.s4 1983009808
        %v828 = vunpack.c.0.s8 %v827
        %v829 = vlaneseq
        %v830 = vshrl.u32 %v829, 7
        %v831 = vsub.s32 %v828, %v830
        %v832 = vrot.slane %v818, %v831
        %v833 = vcombine.high %v825, %v825
        %v834 = vcombine.high %v832, %v832
        %v835 = vcombine.high %v259, %v259
        %v837 = vunpack.c.l.s4 1983009808
        %v838 = vunpack.c.0.s8 %v837
        %v839 = vlaneseq
        %v840 = vshrl.u32 %v839, 7
        %v841 = vsub.s32 %v838, %v840
        %v842 = vrot.slane %v259, %v841
        %v844 = vunpack.c.l.s4 1983009808
        %v845 = vunpack.c.0.s8 %v844
        %v846 = vlaneseq
        %v847 = vshrl.u32 %v846, 7
        %v848 = vsub.s32 %v845, %v847
        %v849 = vrot.slane %v835, %v848
        %v850 = vcombine.high %v842, %v842
        %v851 = vcombine.high %v849, %v849
        %v852 = vcombine.high %v260, %v260
        %v854 = vunpack.c.l.s4 1983009808
        %v855 = vunpack.c.0.s8 %v854
        %v856 = vlaneseq
        %v857 = vshrl.u32 %v856, 7
        %v858 = vsub.s32 %v855, %v857
        %v859 = vrot.slane %v260, %v858
        %v861 = vunpack.c.l.s4 1983009808
        %v862 = vunpack.c.0.s8 %v861
        %v863 = vlaneseq
        %v864 = vshrl.u32 %v863, 7
        %v865 = vsub.s32 %v862, %v864
        %v866 = vrot.slane %v852, %v865
        %v867 = vcombine.high %v859, %v859
        %v868 = vcombine.high %v866, %v866
        %v869 = vcombine.high %v261, %v261
        %v871 = vunpack.c.l.s4 1983009808
        %v872 = vunpack.c.0.s8 %v871
        %v873 = vlaneseq
        %v874 = vshrl.u32 %v873, 7
        %v875 = vsub.s32 %v872, %v874
        %v876 = vrot.slane %v261, %v875
        %v878 = vunpack.c.l.s4 1983009808
        %v879 = vunpack.c.0.s8 %v878
        %v880 = vlaneseq
        %v881 = vshrl.u32 %v880, 7
        %v882 = vsub.s32 %v879, %v881
        %v883 = vrot.slane %v869, %v882
        %v884 = vcombine.high %v876, %v876
        %v885 = vcombine.high %v883, %v883
        %v886 = vcombine.high %v262, %v262
        %v888 = vunpack.c.l.s4 1983009808
        %v889 = vunpack.c.0.s8 %v888
        %v890 = vlaneseq
        %v891 = vshrl.u32 %v890, 7
        %v892 = vsub.s32 %v889, %v891
        %v893 = vrot.slane %v262, %v892
        %v895 = vunpack.c.l.s4 1983009808
        %v896 = vunpack.c.0.s8 %v895
        %v897 = vlaneseq
        %v898 = vshrl.u32 %v897, 7
        %v899 = vsub.s32 %v896, %v898
        %v900 = vrot.slane %v886, %v899
        %v901 = vcombine.high %v893, %v893
        %v902 = vcombine.high %v900, %v900
        %v903 = vcombine.high %v263, %v263
        %v905 = vunpack.c.l.s4 1983009808
        %v906 = vunpack.c.0.s8 %v905
        %v907 = vlaneseq
        %v908 = vshrl.u32 %v907, 7
        %v909 = vsub.s32 %v906, %v908
        %v910 = vrot.slane %v263, %v909
        %v912 = vunpack.c.l.s4 1983009808
        %v913 = vunpack.c.0.s8 %v912
        %v914 = vlaneseq
        %v915 = vshrl.u32 %v914, 7
        %v916 = vsub.s32 %v913, %v915
        %v917 = vrot.slane %v903, %v916
        %v918 = vcombine.high %v910, %v910
        %v919 = vcombine.high %v917, %v917
        %952 = vmatprep.subr.mxu0 0.0
        %953 = vmatpush1.msra.mxu0 %v279
        %954 = vmatprep.subr.mxu0 0.0
        %955 = vmatpush1.msra.mxu0 %v278
        %956 = vmatprep.subr.mxu0 0.0
        %957 = vmatpush1.msra.mxu0 %v277
        %958 = vmatprep.subr.mxu0 0.0
        %959 = vmatpush1.msra.mxu0 %v276
        %960 = vmatprep.subr.mxu0 0.0
        %961 = vmatpush1.msra.mxu0 %v275
        %962 = vmatprep.subr.mxu0 0.0
        %963 = vmatpush1.msra.mxu0 %v274
        %964 = vmatprep.subr.mxu0 0.0
        %965 = vmatpush1.msra.mxu0 %v273
        %966 = vmatprep.subr.mxu0 0.0
        %967 = vmatpush1.msra.mxu0 %v272
        %968 = vmatprep.subr.mxu0 0.0
        %969 = vmatpush1.msra.mxu0 %v271
        %970 = vmatprep.subr.mxu0 0.0
        %971 = vmatpush1.msra.mxu0 %v270
        %972 = vmatprep.subr.mxu0 0.0
        %973 = vmatpush1.msra.mxu0 %v269
        %974 = vmatprep.subr.mxu0 0.0
        %975 = vmatpush1.msra.mxu0 %v268
        %976 = vmatprep.subr.mxu0 0.0
        %977 = vmatpush1.msra.mxu0 %v267
        %978 = vmatprep.subr.mxu0 0.0
        %979 = vmatpush1.msra.mxu0 %v266
        %980 = vmatprep.subr.mxu0 0.0
        %981 = vmatpush1.msra.mxu0 %v265
        %982 = vmatprep.subr.mxu0 0.0
        %983 = vmatpush1.msra.mxu0 %v264
        %984 = vmatprep.subr.mxu0 0.0
        %985 = vmatpush2.msra.mxu0 %v295
        %986 = vmatprep.subr.mxu0 0.0
        %987 = vmatpush2.msra.mxu0 %v294
        %988 = vmatprep.subr.mxu0 0.0
        %989 = vmatpush2.msra.mxu0 %v293
        %990 = vmatprep.subr.mxu0 0.0
        %991 = vmatpush2.msra.mxu0 %v292
        %992 = vmatprep.subr.mxu0 0.0
        %993 = vmatpush2.msra.mxu0 %v291
        %994 = vmatprep.subr.mxu0 0.0
        %995 = vmatpush2.msra.mxu0 %v290
        %996 = vmatprep.subr.mxu0 0.0
        %997 = vmatpush2.msra.mxu0 %v289
        %998 = vmatprep.subr.mxu0 0.0
        %999 = vmatpush2.msra.mxu0 %v288
        %1000 = vmatprep.subr.mxu0 0.0
        %1001 = vmatpush2.msra.mxu0 %v287
        %1002 = vmatprep.subr.mxu0 0.0
        %1003 = vmatpush2.msra.mxu0 %v286
        %1004 = vmatprep.subr.mxu0 0.0
        %1005 = vmatpush2.msra.mxu0 %v285
        %1006 = vmatprep.subr.mxu0 0.0
        %1007 = vmatpush2.msra.mxu0 %v284
        %1008 = vmatprep.subr.mxu0 0.0
        %1009 = vmatpush2.msra.mxu0 %v283
        %1010 = vmatprep.subr.mxu0 0.0
        %1011 = vmatpush2.msra.mxu0 %v282
        %1012 = vmatprep.subr.mxu0 0.0
        %1013 = vmatpush2.msra.mxu0 %v281
        %1014 = vmatprep.subr.mxu0 0.0
        %1015 = vmatpush2.msra.mxu0 %v280
        %1016 = vmatprep.mubr.f32.mxu0 %v799
        %1017 = vmatmul.mubr.f32.gmra.mxu0 %v791
        %v1018 = vpop.f32.mrf.mxu0
        %v1019 = vadd.f32 0.0, %v1018
        %v1020 = vpop.f32.mrf.mxu0
        %1021 = vdwg.mxu0
        %1022 = vmatprep.subr.mxu0 0.0
        %1023 = vmatpush1.msra.mxu0 %v311
        %1024 = vmatprep.subr.mxu0 0.0
        %1025 = vmatpush1.msra.mxu0 %v310
        %1026 = vmatprep.subr.mxu0 0.0
        %1027 = vmatpush1.msra.mxu0 %v309
        %1028 = vmatprep.subr.mxu0 0.0
        %1029 = vmatpush1.msra.mxu0 %v308
        %1030 = vmatprep.subr.mxu0 0.0
        %1031 = vmatpush1.msra.mxu0 %v307
        %1032 = vmatprep.subr.mxu0 0.0
        %1033 = vmatpush1.msra.mxu0 %v306
        %1034 = vmatprep.subr.mxu0 0.0
        %1035 = vmatpush1.msra.mxu0 %v305
        %1036 = vmatprep.subr.mxu0 0.0
        %1037 = vmatpush1.msra.mxu0 %v304
        %1038 = vmatprep.subr.mxu0 0.0
        %1039 = vmatpush1.msra.mxu0 %v303
        %1040 = vmatprep.subr.mxu0 0.0
        %1041 = vmatpush1.msra.mxu0 %v302
        %1042 = vmatprep.subr.mxu0 0.0
        %1043 = vmatpush1.msra.mxu0 %v301
        %1044 = vmatprep.subr.mxu0 0.0
        %1045 = vmatpush1.msra.mxu0 %v300
        %1046 = vmatprep.subr.mxu0 0.0
        %1047 = vmatpush1.msra.mxu0 %v299
        %1048 = vmatprep.subr.mxu0 0.0
        %1049 = vmatpush1.msra.mxu0 %v298
        %1050 = vmatprep.subr.mxu0 0.0
        %1051 = vmatpush1.msra.mxu0 %v297
        %1052 = vmatprep.subr.mxu0 0.0
        %1053 = vmatpush1.msra.mxu0 %v296
        %1054 = vmatprep.subr.mxu0 0.0
        %1055 = vmatpush2.msra.mxu0 %v327
        %1056 = vmatprep.subr.mxu0 0.0
        %1057 = vmatpush2.msra.mxu0 %v326
        %1058 = vmatprep.subr.mxu0 0.0
        %1059 = vmatpush2.msra.mxu0 %v325
        %1060 = vmatprep.subr.mxu0 0.0
        %1061 = vmatpush2.msra.mxu0 %v324
        %1062 = vmatprep.subr.mxu0 0.0
        %1063 = vmatpush2.msra.mxu0 %v323
        %1064 = vmatprep.subr.mxu0 0.0
        %1065 = vmatpush2.msra.mxu0 %v322
        %1066 = vmatprep.subr.mxu0 0.0
        %1067 = vmatpush2.msra.mxu0 %v321
        %1068 = vmatprep.subr.mxu0 0.0
        %1069 = vmatpush2.msra.mxu0 %v320
        %1070 = vmatprep.subr.mxu0 0.0
        %1071 = vmatpush2.msra.mxu0 %v319
        %1072 = vmatprep.subr.mxu0 0.0
        %1073 = vmatpush2.msra.mxu0 %v318
        %1074 = vmatprep.subr.mxu0 0.0
        %1075 = vmatpush2.msra.mxu0 %v317
        %1076 = vmatprep.subr.mxu0 0.0
        %1077 = vmatpush2.msra.mxu0 %v316
        %1078 = vmatprep.subr.mxu0 0.0
        %1079 = vmatpush2.msra.mxu0 %v315
        %1080 = vmatprep.subr.mxu0 0.0
        %1081 = vmatpush2.msra.mxu0 %v314
        %1082 = vmatprep.subr.mxu0 0.0
        %1083 = vmatpush2.msra.mxu0 %v313
        %1084 = vmatprep.subr.mxu0 0.0
        %1085 = vmatpush2.msra.mxu0 %v312
        %1086 = vmatprep.mubr.f32.mxu0 %v800
        %1087 = vmatmul.mubr.f32.gmra.mxu0 %v798
        %v1088 = vpop.f32.mrf.mxu0
        %v1089 = vadd.f32 %v1019, %v1088
        %v1090 = vpop.f32.mrf.mxu0
        %1091 = vdwg.mxu0
        %1092 = vmatprep.subr.mxu0 0.0
        %1093 = vmatpush1.msra.mxu0 %v343
        %1094 = vmatprep.subr.mxu0 0.0
        %1095 = vmatpush1.msra.mxu0 %v342
        %1096 = vmatprep.subr.mxu0 0.0
        %1097 = vmatpush1.msra.mxu0 %v341
        %1098 = vmatprep.subr.mxu0 0.0
        %1099 = vmatpush1.msra.mxu0 %v340
        %1100 = vmatprep.subr.mxu0 0.0
        %1101 = vmatpush1.msra.mxu0 %v339
        %1102 = vmatprep.subr.mxu0 0.0
        %1103 = vmatpush1.msra.mxu0 %v338
        %1104 = vmatprep.subr.mxu0 0.0
        %1105 = vmatpush1.msra.mxu0 %v337
        %1106 = vmatprep.subr.mxu0 0.0
        %1107 = vmatpush1.msra.mxu0 %v336
        %1108 = vmatprep.subr.mxu0 0.0
        %1109 = vmatpush1.msra.mxu0 %v335
        %1110 = vmatprep.subr.mxu0 0.0
        %1111 = vmatpush1.msra.mxu0 %v334
        %1112 = vmatprep.subr.mxu0 0.0
        %1113 = vmatpush1.msra.mxu0 %v333
        %1114 = vmatprep.subr.mxu0 0.0
        %1115 = vmatpush1.msra.mxu0 %v332
        %1116 = vmatprep.subr.mxu0 0.0
        %1117 = vmatpush1.msra.mxu0 %v331
        %1118 = vmatprep.subr.mxu0 0.0
        %1119 = vmatpush1.msra.mxu0 %v330
        %1120 = vmatprep.subr.mxu0 0.0
        %1121 = vmatpush1.msra.mxu0 %v329
        %1122 = vmatprep.subr.mxu0 0.0
        %1123 = vmatpush1.msra.mxu0 %v328
        %1124 = vmatprep.subr.mxu0 0.0
        %1125 = vmatpush2.msra.mxu0 %v359
        %1126 = vmatprep.subr.mxu0 0.0
        %1127 = vmatpush2.msra.mxu0 %v358
        %1128 = vmatprep.subr.mxu0 0.0
        %1129 = vmatpush2.msra.mxu0 %v357
        %1130 = vmatprep.subr.mxu0 0.0
        %1131 = vmatpush2.msra.mxu0 %v356
        %1132 = vmatprep.subr.mxu0 0.0
        %1133 = vmatpush2.msra.mxu0 %v355
        %1134 = vmatprep.subr.mxu0 0.0
        %1135 = vmatpush2.msra.mxu0 %v354
        %1136 = vmatprep.subr.mxu0 0.0
        %1137 = vmatpush2.msra.mxu0 %v353
        %1138 = vmatprep.subr.mxu0 0.0
        %1139 = vmatpush2.msra.mxu0 %v352
        %1140 = vmatprep.subr.mxu0 0.0
        %1141 = vmatpush2.msra.mxu0 %v351
        %1142 = vmatprep.subr.mxu0 0.0
        %1143 = vmatpush2.msra.mxu0 %v350
        %1144 = vmatprep.subr.mxu0 0.0
        %1145 = vmatpush2.msra.mxu0 %v349
        %1146 = vmatprep.subr.mxu0 0.0
        %1147 = vmatpush2.msra.mxu0 %v348
        %1148 = vmatprep.subr.mxu0 0.0
        %1149 = vmatpush2.msra.mxu0 %v347
        %1150 = vmatprep.subr.mxu0 0.0
        %1151 = vmatpush2.msra.mxu0 %v346
        %1152 = vmatprep.subr.mxu0 0.0
        %1153 = vmatpush2.msra.mxu0 %v345
        %1154 = vmatprep.subr.mxu0 0.0
        %1155 = vmatpush2.msra.mxu0 %v344
        %1156 = vmatprep.mubr.f32.mxu0 %v816
        %1157 = vmatmul.mubr.f32.gmra.mxu0 %v808
        %v1158 = vpop.f32.mrf.mxu0
        %v1159 = vadd.f32 %v1089, %v1158
        %v1160 = vpop.f32.mrf.mxu0
        %1161 = vdwg.mxu0
        %1162 = vmatprep.subr.mxu0 0.0
        %1163 = vmatpush1.msra.mxu0 %v375
        %1164 = vmatprep.subr.mxu0 0.0
        %1165 = vmatpush1.msra.mxu0 %v374
        %1166 = vmatprep.subr.mxu0 0.0
        %1167 = vmatpush1.msra.mxu0 %v373
        %1168 = vmatprep.subr.mxu0 0.0
        %1169 = vmatpush1.msra.mxu0 %v372
        %1170 = vmatprep.subr.mxu0 0.0
        %1171 = vmatpush1.msra.mxu0 %v371
        %1172 = vmatprep.subr.mxu0 0.0
        %1173 = vmatpush1.msra.mxu0 %v370
        %1174 = vmatprep.subr.mxu0 0.0
        %1175 = vmatpush1.msra.mxu0 %v369
        %1176 = vmatprep.subr.mxu0 0.0
        %1177 = vmatpush1.msra.mxu0 %v368
        %1178 = vmatprep.subr.mxu0 0.0
        %1179 = vmatpush1.msra.mxu0 %v367
        %1180 = vmatprep.subr.mxu0 0.0
        %1181 = vmatpush1.msra.mxu0 %v366
        %1182 = vmatprep.subr.mxu0 0.0
        %1183 = vmatpush1.msra.mxu0 %v365
        %1184 = vmatprep.subr.mxu0 0.0
        %1185 = vmatpush1.msra.mxu0 %v364
        %1186 = vmatprep.subr.mxu0 0.0
        %1187 = vmatpush1.msra.mxu0 %v363
        %1188 = vmatprep.subr.mxu0 0.0
        %1189 = vmatpush1.msra.mxu0 %v362
        %1190 = vmatprep.subr.mxu0 0.0
        %1191 = vmatpush1.msra.mxu0 %v361
        %1192 = vmatprep.subr.mxu0 0.0
        %1193 = vmatpush1.msra.mxu0 %v360
        %1194 = vmatprep.subr.mxu0 0.0
        %1195 = vmatpush2.msra.mxu0 %v391
        %1196 = vmatprep.subr.mxu0 0.0
        %1197 = vmatpush2.msra.mxu0 %v390
        %1198 = vmatprep.subr.mxu0 0.0
        %1199 = vmatpush2.msra.mxu0 %v389
        %1200 = vmatprep.subr.mxu0 0.0
        %1201 = vmatpush2.msra.mxu0 %v388
        %1202 = vmatprep.subr.mxu0 0.0
        %1203 = vmatpush2.msra.mxu0 %v387
        %1204 = vmatprep.subr.mxu0 0.0
        %1205 = vmatpush2.msra.mxu0 %v386
        %1206 = vmatprep.subr.mxu0 0.0
        %1207 = vmatpush2.msra.mxu0 %v385
        %1208 = vmatprep.subr.mxu0 0.0
        %1209 = vmatpush2.msra.mxu0 %v384
        %1210 = vmatprep.subr.mxu0 0.0
        %1211 = vmatpush2.msra.mxu0 %v383
        %1212 = vmatprep.subr.mxu0 0.0
        %1213 = vmatpush2.msra.mxu0 %v382
        %1214 = vmatprep.subr.mxu0 0.0
        %1215 = vmatpush2.msra.mxu0 %v381
        %1216 = vmatprep.subr.mxu0 0.0
        %1217 = vmatpush2.msra.mxu0 %v380
        %1218 = vmatprep.subr.mxu0 0.0
        %1219 = vmatpush2.msra.mxu0 %v379
        %1220 = vmatprep.subr.mxu0 0.0
        %1221 = vmatpush2.msra.mxu0 %v378
        %1222 = vmatprep.subr.mxu0 0.0
        %1223 = vmatpush2.msra.mxu0 %v377
        %1224 = vmatprep.subr.mxu0 0.0
        %1225 = vmatpush2.msra.mxu0 %v376
        %1226 = vmatprep.mubr.f32.mxu0 %v817
        %1227 = vmatmul.mubr.f32.gmra.mxu0 %v815
        %v1228 = vpop.f32.mrf.mxu0
        %v1229 = vadd.f32 %v1159, %v1228
        %v1230 = vpop.f32.mrf.mxu0
        %1231 = vdwg.mxu0
        %1232 = vmatprep.subr.mxu0 0.0
        %1233 = vmatpush1.msra.mxu0 %v407
        %1234 = vmatprep.subr.mxu0 0.0
        %1235 = vmatpush1.msra.mxu0 %v406
        %1236 = vmatprep.subr.mxu0 0.0
        %1237 = vmatpush1.msra.mxu0 %v405
        %1238 = vmatprep.subr.mxu0 0.0
        %1239 = vmatpush1.msra.mxu0 %v404
        %1240 = vmatprep.subr.mxu0 0.0
        %1241 = vmatpush1.msra.mxu0 %v403
        %1242 = vmatprep.subr.mxu0 0.0
        %1243 = vmatpush1.msra.mxu0 %v402
        %1244 = vmatprep.subr.mxu0 0.0
        %1245 = vmatpush1.msra.mxu0 %v401
        %1246 = vmatprep.subr.mxu0 0.0
        %1247 = vmatpush1.msra.mxu0 %v400
        %1248 = vmatprep.subr.mxu0 0.0
        %1249 = vmatpush1.msra.mxu0 %v399
        %1250 = vmatprep.subr.mxu0 0.0
        %1251 = vmatpush1.msra.mxu0 %v398
        %1252 = vmatprep.subr.mxu0 0.0
        %1253 = vmatpush1.msra.mxu0 %v397
        %1254 = vmatprep.subr.mxu0 0.0
        %1255 = vmatpush1.msra.mxu0 %v396
        %1256 = vmatprep.subr.mxu0 0.0
        %1257 = vmatpush1.msra.mxu0 %v395
        %1258 = vmatprep.subr.mxu0 0.0
        %1259 = vmatpush1.msra.mxu0 %v394
        %1260 = vmatprep.subr.mxu0 0.0
        %1261 = vmatpush1.msra.mxu0 %v393
        %1262 = vmatprep.subr.mxu0 0.0
        %1263 = vmatpush1.msra.mxu0 %v392
        %1264 = vmatprep.subr.mxu0 0.0
        %1265 = vmatpush2.msra.mxu0 %v423
        %1266 = vmatprep.subr.mxu0 0.0
        %1267 = vmatpush2.msra.mxu0 %v422
        %1268 = vmatprep.subr.mxu0 0.0
        %1269 = vmatpush2.msra.mxu0 %v421
        %1270 = vmatprep.subr.mxu0 0.0
        %1271 = vmatpush2.msra.mxu0 %v420
        %1272 = vmatprep.subr.mxu0 0.0
        %1273 = vmatpush2.msra.mxu0 %v419
        %1274 = vmatprep.subr.mxu0 0.0
        %1275 = vmatpush2.msra.mxu0 %v418
        %1276 = vmatprep.subr.mxu0 0.0
        %1277 = vmatpush2.msra.mxu0 %v417
        %1278 = vmatprep.subr.mxu0 0.0
        %1279 = vmatpush2.msra.mxu0 %v416
        %1280 = vmatprep.subr.mxu0 0.0
        %1281 = vmatpush2.msra.mxu0 %v415
        %1282 = vmatprep.subr.mxu0 0.0
        %1283 = vmatpush2.msra.mxu0 %v414
        %1284 = vmatprep.subr.mxu0 0.0
        %1285 = vmatpush2.msra.mxu0 %v413
        %1286 = vmatprep.subr.mxu0 0.0
        %1287 = vmatpush2.msra.mxu0 %v412
        %1288 = vmatprep.subr.mxu0 0.0
        %1289 = vmatpush2.msra.mxu0 %v411
        %1290 = vmatprep.subr.mxu0 0.0
        %1291 = vmatpush2.msra.mxu0 %v410
        %1292 = vmatprep.subr.mxu0 0.0
        %1293 = vmatpush2.msra.mxu0 %v409
        %1294 = vmatprep.subr.mxu0 0.0
        %1295 = vmatpush2.msra.mxu0 %v408
        %1296 = vmatprep.mubr.f32.mxu0 %v833
        %1297 = vmatmul.mubr.f32.gmra.mxu0 %v825
        %v1298 = vpop.f32.mrf.mxu0
        %v1299 = vadd.f32 %v1229, %v1298
        %v1300 = vpop.f32.mrf.mxu0
        %1301 = vdwg.mxu0
        %1302 = vmatprep.subr.mxu0 0.0
        %1303 = vmatpush1.msra.mxu0 %v439
        %1304 = vmatprep.subr.mxu0 0.0
        %1305 = vmatpush1.msra.mxu0 %v438
        %1306 = vmatprep.subr.mxu0 0.0
        %1307 = vmatpush1.msra.mxu0 %v437
        %1308 = vmatprep.subr.mxu0 0.0
        %1309 = vmatpush1.msra.mxu0 %v436
        %1310 = vmatprep.subr.mxu0 0.0
        %1311 = vmatpush1.msra.mxu0 %v435
        %1312 = vmatprep.subr.mxu0 0.0
        %1313 = vmatpush1.msra.mxu0 %v434
        %1314 = vmatprep.subr.mxu0 0.0
        %1315 = vmatpush1.msra.mxu0 %v433
        %1316 = vmatprep.subr.mxu0 0.0
        %1317 = vmatpush1.msra.mxu0 %v432
        %1318 = vmatprep.subr.mxu0 0.0
        %1319 = vmatpush1.msra.mxu0 %v431
        %1320 = vmatprep.subr.mxu0 0.0
        %1321 = vmatpush1.msra.mxu0 %v430
        %1322 = vmatprep.subr.mxu0 0.0
        %1323 = vmatpush1.msra.mxu0 %v429
        %1324 = vmatprep.subr.mxu0 0.0
        %1325 = vmatpush1.msra.mxu0 %v428
        %1326 = vmatprep.subr.mxu0 0.0
        %1327 = vmatpush1.msra.mxu0 %v427
        %1328 = vmatprep.subr.mxu0 0.0
        %1329 = vmatpush1.msra.mxu0 %v426
        %1330 = vmatprep.subr.mxu0 0.0
        %1331 = vmatpush1.msra.mxu0 %v425
        %1332 = vmatprep.subr.mxu0 0.0
        %1333 = vmatpush1.msra.mxu0 %v424
        %1334 = vmatprep.subr.mxu0 0.0
        %1335 = vmatpush2.msra.mxu0 %v455
        %1336 = vmatprep.subr.mxu0 0.0
        %1337 = vmatpush2.msra.mxu0 %v454
        %1338 = vmatprep.subr.mxu0 0.0
        %1339 = vmatpush2.msra.mxu0 %v453
        %1340 = vmatprep.subr.mxu0 0.0
        %1341 = vmatpush2.msra.mxu0 %v452
        %1342 = vmatprep.subr.mxu0 0.0
        %1343 = vmatpush2.msra.mxu0 %v451
        %1344 = vmatprep.subr.mxu0 0.0
        %1345 = vmatpush2.msra.mxu0 %v450
        %1346 = vmatprep.subr.mxu0 0.0
        %1347 = vmatpush2.msra.mxu0 %v449
        %1348 = vmatprep.subr.mxu0 0.0
        %1349 = vmatpush2.msra.mxu0 %v448
        %1350 = vmatprep.subr.mxu0 0.0
        %1351 = vmatpush2.msra.mxu0 %v447
        %1352 = vmatprep.subr.mxu0 0.0
        %1353 = vmatpush2.msra.mxu0 %v446
        %1354 = vmatprep.subr.mxu0 0.0
        %1355 = vmatpush2.msra.mxu0 %v445
        %1356 = vmatprep.subr.mxu0 0.0
        %1357 = vmatpush2.msra.mxu0 %v444
        %1358 = vmatprep.subr.mxu0 0.0
        %1359 = vmatpush2.msra.mxu0 %v443
        %1360 = vmatprep.subr.mxu0 0.0
        %1361 = vmatpush2.msra.mxu0 %v442
        %1362 = vmatprep.subr.mxu0 0.0
        %1363 = vmatpush2.msra.mxu0 %v441
        %1364 = vmatprep.subr.mxu0 0.0
        %1365 = vmatpush2.msra.mxu0 %v440
        %1366 = vmatprep.mubr.f32.mxu0 %v834
        %1367 = vmatmul.mubr.f32.gmra.mxu0 %v832
        %v1368 = vpop.f32.mrf.mxu0
        %v1369 = vadd.f32 %v1299, %v1368
        %v1370 = vpop.f32.mrf.mxu0
        %1371 = vdwg.mxu0
        %1372 = vmatprep.subr.mxu0 0.0
        %1373 = vmatpush1.msra.mxu0 %v471
        %1374 = vmatprep.subr.mxu0 0.0
        %1375 = vmatpush1.msra.mxu0 %v470
        %1376 = vmatprep.subr.mxu0 0.0
        %1377 = vmatpush1.msra.mxu0 %v469
        %1378 = vmatprep.subr.mxu0 0.0
        %1379 = vmatpush1.msra.mxu0 %v468
        %1380 = vmatprep.subr.mxu0 0.0
        %1381 = vmatpush1.msra.mxu0 %v467
        %1382 = vmatprep.subr.mxu0 0.0
        %1383 = vmatpush1.msra.mxu0 %v466
        %1384 = vmatprep.subr.mxu0 0.0
        %1385 = vmatpush1.msra.mxu0 %v465
        %1386 = vmatprep.subr.mxu0 0.0
        %1387 = vmatpush1.msra.mxu0 %v464
        %1388 = vmatprep.subr.mxu0 0.0
        %1389 = vmatpush1.msra.mxu0 %v463
        %1390 = vmatprep.subr.mxu0 0.0
        %1391 = vmatpush1.msra.mxu0 %v462
        %1392 = vmatprep.subr.mxu0 0.0
        %1393 = vmatpush1.msra.mxu0 %v461
        %1394 = vmatprep.subr.mxu0 0.0
        %1395 = vmatpush1.msra.mxu0 %v460
        %1396 = vmatprep.subr.mxu0 0.0
        %1397 = vmatpush1.msra.mxu0 %v459
        %1398 = vmatprep.subr.mxu0 0.0
        %1399 = vmatpush1.msra.mxu0 %v458
        %1400 = vmatprep.subr.mxu0 0.0
        %1401 = vmatpush1.msra.mxu0 %v457
        %1402 = vmatprep.subr.mxu0 0.0
        %1403 = vmatpush1.msra.mxu0 %v456
        %1404 = vmatprep.subr.mxu0 0.0
        %1405 = vmatpush2.msra.mxu0 %v487
        %1406 = vmatprep.subr.mxu0 0.0
        %1407 = vmatpush2.msra.mxu0 %v486
        %1408 = vmatprep.subr.mxu0 0.0
        %1409 = vmatpush2.msra.mxu0 %v485
        %1410 = vmatprep.subr.mxu0 0.0
        %1411 = vmatpush2.msra.mxu0 %v484
        %1412 = vmatprep.subr.mxu0 0.0
        %1413 = vmatpush2.msra.mxu0 %v483
        %1414 = vmatprep.subr.mxu0 0.0
        %1415 = vmatpush2.msra.mxu0 %v482
        %1416 = vmatprep.subr.mxu0 0.0
        %1417 = vmatpush2.msra.mxu0 %v481
        %1418 = vmatprep.subr.mxu0 0.0
        %1419 = vmatpush2.msra.mxu0 %v480
        %1420 = vmatprep.subr.mxu0 0.0
        %1421 = vmatpush2.msra.mxu0 %v479
        %1422 = vmatprep.subr.mxu0 0.0
        %1423 = vmatpush2.msra.mxu0 %v478
        %1424 = vmatprep.subr.mxu0 0.0
        %1425 = vmatpush2.msra.mxu0 %v477
        %1426 = vmatprep.subr.mxu0 0.0
        %1427 = vmatpush2.msra.mxu0 %v476
        %1428 = vmatprep.subr.mxu0 0.0
        %1429 = vmatpush2.msra.mxu0 %v475
        %1430 = vmatprep.subr.mxu0 0.0
        %1431 = vmatpush2.msra.mxu0 %v474
        %1432 = vmatprep.subr.mxu0 0.0
        %1433 = vmatpush2.msra.mxu0 %v473
        %1434 = vmatprep.subr.mxu0 0.0
        %1435 = vmatpush2.msra.mxu0 %v472
        %1436 = vmatprep.mubr.f32.mxu0 %v850
        %1437 = vmatmul.mubr.f32.gmra.mxu0 %v842
        %v1438 = vpop.f32.mrf.mxu0
        %v1439 = vadd.f32 %v1369, %v1438
        %v1440 = vpop.f32.mrf.mxu0
        %1441 = vdwg.mxu0
        %1442 = vmatprep.subr.mxu0 0.0
        %1443 = vmatpush1.msra.mxu0 %v503
        %1444 = vmatprep.subr.mxu0 0.0
        %1445 = vmatpush1.msra.mxu0 %v502
        %1446 = vmatprep.subr.mxu0 0.0
        %1447 = vmatpush1.msra.mxu0 %v501
        %1448 = vmatprep.subr.mxu0 0.0
        %1449 = vmatpush1.msra.mxu0 %v500
        %1450 = vmatprep.subr.mxu0 0.0
        %1451 = vmatpush1.msra.mxu0 %v499
        %1452 = vmatprep.subr.mxu0 0.0
        %1453 = vmatpush1.msra.mxu0 %v498
        %1454 = vmatprep.subr.mxu0 0.0
        %1455 = vmatpush1.msra.mxu0 %v497
        %1456 = vmatprep.subr.mxu0 0.0
        %1457 = vmatpush1.msra.mxu0 %v496
        %1458 = vmatprep.subr.mxu0 0.0
        %1459 = vmatpush1.msra.mxu0 %v495
        %1460 = vmatprep.subr.mxu0 0.0
        %1461 = vmatpush1.msra.mxu0 %v494
        %1462 = vmatprep.subr.mxu0 0.0
        %1463 = vmatpush1.msra.mxu0 %v493
        %1464 = vmatprep.subr.mxu0 0.0
        %1465 = vmatpush1.msra.mxu0 %v492
        %1466 = vmatprep.subr.mxu0 0.0
        %1467 = vmatpush1.msra.mxu0 %v491
        %1468 = vmatprep.subr.mxu0 0.0
        %1469 = vmatpush1.msra.mxu0 %v490
        %1470 = vmatprep.subr.mxu0 0.0
        %1471 = vmatpush1.msra.mxu0 %v489
        %1472 = vmatprep.subr.mxu0 0.0
        %1473 = vmatpush1.msra.mxu0 %v488
        %1474 = vmatprep.subr.mxu0 0.0
        %1475 = vmatpush2.msra.mxu0 %v519
        %1476 = vmatprep.subr.mxu0 0.0
        %1477 = vmatpush2.msra.mxu0 %v518
        %1478 = vmatprep.subr.mxu0 0.0
        %1479 = vmatpush2.msra.mxu0 %v517
        %1480 = vmatprep.subr.mxu0 0.0
        %1481 = vmatpush2.msra.mxu0 %v516
        %1482 = vmatprep.subr.mxu0 0.0
        %1483 = vmatpush2.msra.mxu0 %v515
        %1484 = vmatprep.subr.mxu0 0.0
        %1485 = vmatpush2.msra.mxu0 %v514
        %1486 = vmatprep.subr.mxu0 0.0
        %1487 = vmatpush2.msra.mxu0 %v513
        %1488 = vmatprep.subr.mxu0 0.0
        %1489 = vmatpush2.msra.mxu0 %v512
        %1490 = vmatprep.subr.mxu0 0.0
        %1491 = vmatpush2.msra.mxu0 %v511
        %1492 = vmatprep.subr.mxu0 0.0
        %1493 = vmatpush2.msra.mxu0 %v510
        %1494 = vmatprep.subr.mxu0 0.0
        %1495 = vmatpush2.msra.mxu0 %v509
        %1496 = vmatprep.subr.mxu0 0.0
        %1497 = vmatpush2.msra.mxu0 %v508
        %1498 = vmatprep.subr.mxu0 0.0
        %1499 = vmatpush2.msra.mxu0 %v507
        %1500 = vmatprep.subr.mxu0 0.0
        %1501 = vmatpush2.msra.mxu0 %v506
        %1502 = vmatprep.subr.mxu0 0.0
        %1503 = vmatpush2.msra.mxu0 %v505
        %1504 = vmatprep.subr.mxu0 0.0
        %1505 = vmatpush2.msra.mxu0 %v504
        %1506 = vmatprep.mubr.f32.mxu0 %v851
        %1507 = vmatmul.mubr.f32.gmra.mxu0 %v849
        %v1508 = vpop.f32.mrf.mxu0
        %v1509 = vadd.f32 %v1439, %v1508
        %v1510 = vpop.f32.mrf.mxu0
        %1511 = vdwg.mxu0
        %1512 = vmatprep.subr.mxu0 0.0
        %1513 = vmatpush1.msra.mxu0 %v535
        %1514 = vmatprep.subr.mxu0 0.0
        %1515 = vmatpush1.msra.mxu0 %v534
        %1516 = vmatprep.subr.mxu0 0.0
        %1517 = vmatpush1.msra.mxu0 %v533
        %1518 = vmatprep.subr.mxu0 0.0
        %1519 = vmatpush1.msra.mxu0 %v532
        %1520 = vmatprep.subr.mxu0 0.0
        %1521 = vmatpush1.msra.mxu0 %v531
        %1522 = vmatprep.subr.mxu0 0.0
        %1523 = vmatpush1.msra.mxu0 %v530
        %1524 = vmatprep.subr.mxu0 0.0
        %1525 = vmatpush1.msra.mxu0 %v529
        %1526 = vmatprep.subr.mxu0 0.0
        %1527 = vmatpush1.msra.mxu0 %v528
        %1528 = vmatprep.subr.mxu0 0.0
        %1529 = vmatpush1.msra.mxu0 %v527
        %1530 = vmatprep.subr.mxu0 0.0
        %1531 = vmatpush1.msra.mxu0 %v526
        %1532 = vmatprep.subr.mxu0 0.0
        %1533 = vmatpush1.msra.mxu0 %v525
        %1534 = vmatprep.subr.mxu0 0.0
        %1535 = vmatpush1.msra.mxu0 %v524
        %1536 = vmatprep.subr.mxu0 0.0
        %1537 = vmatpush1.msra.mxu0 %v523
        %1538 = vmatprep.subr.mxu0 0.0
        %1539 = vmatpush1.msra.mxu0 %v522
        %1540 = vmatprep.subr.mxu0 0.0
        %1541 = vmatpush1.msra.mxu0 %v521
        %1542 = vmatprep.subr.mxu0 0.0
        %1543 = vmatpush1.msra.mxu0 %v520
        %1544 = vmatprep.subr.mxu0 0.0
        %1545 = vmatpush2.msra.mxu0 %v551
        %1546 = vmatprep.subr.mxu0 0.0
        %1547 = vmatpush2.msra.mxu0 %v550
        %1548 = vmatprep.subr.mxu0 0.0
        %1549 = vmatpush2.msra.mxu0 %v549
        %1550 = vmatprep.subr.mxu0 0.0
        %1551 = vmatpush2.msra.mxu0 %v548
        %1552 = vmatprep.subr.mxu0 0.0
        %1553 = vmatpush2.msra.mxu0 %v547
        %1554 = vmatprep.subr.mxu0 0.0
        %1555 = vmatpush2.msra.mxu0 %v546
        %1556 = vmatprep.subr.mxu0 0.0
        %1557 = vmatpush2.msra.mxu0 %v545
        %1558 = vmatprep.subr.mxu0 0.0
        %1559 = vmatpush2.msra.mxu0 %v544
        %1560 = vmatprep.subr.mxu0 0.0
        %1561 = vmatpush2.msra.mxu0 %v543
        %1562 = vmatprep.subr.mxu0 0.0
        %1563 = vmatpush2.msra.mxu0 %v542
        %1564 = vmatprep.subr.mxu0 0.0
        %1565 = vmatpush2.msra.mxu0 %v541
        %1566 = vmatprep.subr.mxu0 0.0
        %1567 = vmatpush2.msra.mxu0 %v540
        %1568 = vmatprep.subr.mxu0 0.0
        %1569 = vmatpush2.msra.mxu0 %v539
        %1570 = vmatprep.subr.mxu0 0.0
        %1571 = vmatpush2.msra.mxu0 %v538
        %1572 = vmatprep.subr.mxu0 0.0
        %1573 = vmatpush2.msra.mxu0 %v537
        %1574 = vmatprep.subr.mxu0 0.0
        %1575 = vmatpush2.msra.mxu0 %v536
        %1576 = vmatprep.mubr.f32.mxu0 %v867
        %1577 = vmatmul.mubr.f32.gmra.mxu0 %v859
        %v1578 = vpop.f32.mrf.mxu0
        %v1579 = vadd.f32 %v1509, %v1578
        %v1580 = vpop.f32.mrf.mxu0
        %1581 = vdwg.mxu0
        %1582 = vmatprep.subr.mxu0 0.0
        %1583 = vmatpush1.msra.mxu0 %v567
        %1584 = vmatprep.subr.mxu0 0.0
        %1585 = vmatpush1.msra.mxu0 %v566
        %1586 = vmatprep.subr.mxu0 0.0
        %1587 = vmatpush1.msra.mxu0 %v565
        %1588 = vmatprep.subr.mxu0 0.0
        %1589 = vmatpush1.msra.mxu0 %v564
        %1590 = vmatprep.subr.mxu0 0.0
        %1591 = vmatpush1.msra.mxu0 %v563
        %1592 = vmatprep.subr.mxu0 0.0
        %1593 = vmatpush1.msra.mxu0 %v562
        %1594 = vmatprep.subr.mxu0 0.0
        %1595 = vmatpush1.msra.mxu0 %v561
        %1596 = vmatprep.subr.mxu0 0.0
        %1597 = vmatpush1.msra.mxu0 %v560
        %1598 = vmatprep.subr.mxu0 0.0
        %1599 = vmatpush1.msra.mxu0 %v559
        %1600 = vmatprep.subr.mxu0 0.0
        %1601 = vmatpush1.msra.mxu0 %v558
        %1602 = vmatprep.subr.mxu0 0.0
        %1603 = vmatpush1.msra.mxu0 %v557
        %1604 = vmatprep.subr.mxu0 0.0
        %1605 = vmatpush1.msra.mxu0 %v556
        %1606 = vmatprep.subr.mxu0 0.0
        %1607 = vmatpush1.msra.mxu0 %v555
        %1608 = vmatprep.subr.mxu0 0.0
        %1609 = vmatpush1.msra.mxu0 %v554
        %1610 = vmatprep.subr.mxu0 0.0
        %1611 = vmatpush1.msra.mxu0 %v553
        %1612 = vmatprep.subr.mxu0 0.0
        %1613 = vmatpush1.msra.mxu0 %v552
        %1614 = vmatprep.subr.mxu0 0.0
        %1615 = vmatpush2.msra.mxu0 %v583
        %1616 = vmatprep.subr.mxu0 0.0
        %1617 = vmatpush2.msra.mxu0 %v582
        %1618 = vmatprep.subr.mxu0 0.0
        %1619 = vmatpush2.msra.mxu0 %v581
        %1620 = vmatprep.subr.mxu0 0.0
        %1621 = vmatpush2.msra.mxu0 %v580
        %1622 = vmatprep.subr.mxu0 0.0
        %1623 = vmatpush2.msra.mxu0 %v579
        %1624 = vmatprep.subr.mxu0 0.0
        %1625 = vmatpush2.msra.mxu0 %v578
        %1626 = vmatprep.subr.mxu0 0.0
        %1627 = vmatpush2.msra.mxu0 %v577
        %1628 = vmatprep.subr.mxu0 0.0
        %1629 = vmatpush2.msra.mxu0 %v576
        %1630 = vmatprep.subr.mxu0 0.0
        %1631 = vmatpush2.msra.mxu0 %v575
        %1632 = vmatprep.subr.mxu0 0.0
        %1633 = vmatpush2.msra.mxu0 %v574
        %1634 = vmatprep.subr.mxu0 0.0
        %1635 = vmatpush2.msra.mxu0 %v573
        %1636 = vmatprep.subr.mxu0 0.0
        %1637 = vmatpush2.msra.mxu0 %v572
        %1638 = vmatprep.subr.mxu0 0.0
        %1639 = vmatpush2.msra.mxu0 %v571
        %1640 = vmatprep.subr.mxu0 0.0
        %1641 = vmatpush2.msra.mxu0 %v570
        %1642 = vmatprep.subr.mxu0 0.0
        %1643 = vmatpush2.msra.mxu0 %v569
        %1644 = vmatprep.subr.mxu0 0.0
        %1645 = vmatpush2.msra.mxu0 %v568
        %1646 = vmatprep.mubr.f32.mxu0 %v868
        %1647 = vmatmul.mubr.f32.gmra.mxu0 %v866
        %v1648 = vpop.f32.mrf.mxu0
        %v1649 = vadd.f32 %v1579, %v1648
        %v1650 = vpop.f32.mrf.mxu0
        %1651 = vdwg.mxu0
        %1652 = vmatprep.subr.mxu0 0.0
        %1653 = vmatpush1.msra.mxu0 %v599
        %1654 = vmatprep.subr.mxu0 0.0
        %1655 = vmatpush1.msra.mxu0 %v598
        %1656 = vmatprep.subr.mxu0 0.0
        %1657 = vmatpush1.msra.mxu0 %v597
        %1658 = vmatprep.subr.mxu0 0.0
        %1659 = vmatpush1.msra.mxu0 %v596
        %1660 = vmatprep.subr.mxu0 0.0
        %1661 = vmatpush1.msra.mxu0 %v595
        %1662 = vmatprep.subr.mxu0 0.0
        %1663 = vmatpush1.msra.mxu0 %v594
        %1664 = vmatprep.subr.mxu0 0.0
        %1665 = vmatpush1.msra.mxu0 %v593
        %1666 = vmatprep.subr.mxu0 0.0
        %1667 = vmatpush1.msra.mxu0 %v592
        %1668 = vmatprep.subr.mxu0 0.0
        %1669 = vmatpush1.msra.mxu0 %v591
        %1670 = vmatprep.subr.mxu0 0.0
        %1671 = vmatpush1.msra.mxu0 %v590
        %1672 = vmatprep.subr.mxu0 0.0
        %1673 = vmatpush1.msra.mxu0 %v589
        %1674 = vmatprep.subr.mxu0 0.0
        %1675 = vmatpush1.msra.mxu0 %v588
        %1676 = vmatprep.subr.mxu0 0.0
        %1677 = vmatpush1.msra.mxu0 %v587
        %1678 = vmatprep.subr.mxu0 0.0
        %1679 = vmatpush1.msra.mxu0 %v586
        %1680 = vmatprep.subr.mxu0 0.0
        %1681 = vmatpush1.msra.mxu0 %v585
        %1682 = vmatprep.subr.mxu0 0.0
        %1683 = vmatpush1.msra.mxu0 %v584
        %1684 = vmatprep.subr.mxu0 0.0
        %1685 = vmatpush2.msra.mxu0 %v615
        %1686 = vmatprep.subr.mxu0 0.0
        %1687 = vmatpush2.msra.mxu0 %v614
        %1688 = vmatprep.subr.mxu0 0.0
        %1689 = vmatpush2.msra.mxu0 %v613
        %1690 = vmatprep.subr.mxu0 0.0
        %1691 = vmatpush2.msra.mxu0 %v612
        %1692 = vmatprep.subr.mxu0 0.0
        %1693 = vmatpush2.msra.mxu0 %v611
        %1694 = vmatprep.subr.mxu0 0.0
        %1695 = vmatpush2.msra.mxu0 %v610
        %1696 = vmatprep.subr.mxu0 0.0
        %1697 = vmatpush2.msra.mxu0 %v609
        %1698 = vmatprep.subr.mxu0 0.0
        %1699 = vmatpush2.msra.mxu0 %v608
        %1700 = vmatprep.subr.mxu0 0.0
        %1701 = vmatpush2.msra.mxu0 %v607
        %1702 = vmatprep.subr.mxu0 0.0
        %1703 = vmatpush2.msra.mxu0 %v606
        %1704 = vmatprep.subr.mxu0 0.0
        %1705 = vmatpush2.msra.mxu0 %v605
        %1706 = vmatprep.subr.mxu0 0.0
        %1707 = vmatpush2.msra.mxu0 %v604
        %1708 = vmatprep.subr.mxu0 0.0
        %1709 = vmatpush2.msra.mxu0 %v603
        %1710 = vmatprep.subr.mxu0 0.0
        %1711 = vmatpush2.msra.mxu0 %v602
        %1712 = vmatprep.subr.mxu0 0.0
        %1713 = vmatpush2.msra.mxu0 %v601
        %1714 = vmatprep.subr.mxu0 0.0
        %1715 = vmatpush2.msra.mxu0 %v600
        %1716 = vmatprep.mubr.f32.mxu0 %v884
        %1717 = vmatmul.mubr.f32.gmra.mxu0 %v876
        %v1718 = vpop.f32.mrf.mxu0
        %v1719 = vadd.f32 %v1649, %v1718
        %v1720 = vpop.f32.mrf.mxu0
        %1721 = vdwg.mxu0
        %1722 = vmatprep.subr.mxu0 0.0
        %1723 = vmatpush1.msra.mxu0 %v631
        %1724 = vmatprep.subr.mxu0 0.0
        %1725 = vmatpush1.msra.mxu0 %v630
        %1726 = vmatprep.subr.mxu0 0.0
        %1727 = vmatpush1.msra.mxu0 %v629
        %1728 = vmatprep.subr.mxu0 0.0
        %1729 = vmatpush1.msra.mxu0 %v628
        %1730 = vmatprep.subr.mxu0 0.0
        %1731 = vmatpush1.msra.mxu0 %v627
        %1732 = vmatprep.subr.mxu0 0.0
        %1733 = vmatpush1.msra.mxu0 %v626
        %1734 = vmatprep.subr.mxu0 0.0
        %1735 = vmatpush1.msra.mxu0 %v625
        %1736 = vmatprep.subr.mxu0 0.0
        %1737 = vmatpush1.msra.mxu0 %v624
        %1738 = vmatprep.subr.mxu0 0.0
        %1739 = vmatpush1.msra.mxu0 %v623
        %1740 = vmatprep.subr.mxu0 0.0
        %1741 = vmatpush1.msra.mxu0 %v622
        %1742 = vmatprep.subr.mxu0 0.0
        %1743 = vmatpush1.msra.mxu0 %v621
        %1744 = vmatprep.subr.mxu0 0.0
        %1745 = vmatpush1.msra.mxu0 %v620
        %1746 = vmatprep.subr.mxu0 0.0
        %1747 = vmatpush1.msra.mxu0 %v619
        %1748 = vmatprep.subr.mxu0 0.0
        %1749 = vmatpush1.msra.mxu0 %v618
        %1750 = vmatprep.subr.mxu0 0.0
        %1751 = vmatpush1.msra.mxu0 %v617
        %1752 = vmatprep.subr.mxu0 0.0
        %1753 = vmatpush1.msra.mxu0 %v616
        %1754 = vmatprep.subr.mxu0 0.0
        %1755 = vmatpush2.msra.mxu0 %v647
        %1756 = vmatprep.subr.mxu0 0.0
        %1757 = vmatpush2.msra.mxu0 %v646
        %1758 = vmatprep.subr.mxu0 0.0
        %1759 = vmatpush2.msra.mxu0 %v645
        %1760 = vmatprep.subr.mxu0 0.0
        %1761 = vmatpush2.msra.mxu0 %v644
        %1762 = vmatprep.subr.mxu0 0.0
        %1763 = vmatpush2.msra.mxu0 %v643
        %1764 = vmatprep.subr.mxu0 0.0
        %1765 = vmatpush2.msra.mxu0 %v642
        %1766 = vmatprep.subr.mxu0 0.0
        %1767 = vmatpush2.msra.mxu0 %v641
        %1768 = vmatprep.subr.mxu0 0.0
        %1769 = vmatpush2.msra.mxu0 %v640
        %1770 = vmatprep.subr.mxu0 0.0
        %1771 = vmatpush2.msra.mxu0 %v639
        %1772 = vmatprep.subr.mxu0 0.0
        %1773 = vmatpush2.msra.mxu0 %v638
        %1774 = vmatprep.subr.mxu0 0.0
        %1775 = vmatpush2.msra.mxu0 %v637
        %1776 = vmatprep.subr.mxu0 0.0
        %1777 = vmatpush2.msra.mxu0 %v636
        %1778 = vmatprep.subr.mxu0 0.0
        %1779 = vmatpush2.msra.mxu0 %v635
        %1780 = vmatprep.subr.mxu0 0.0
        %1781 = vmatpush2.msra.mxu0 %v634
        %1782 = vmatprep.subr.mxu0 0.0
        %1783 = vmatpush2.msra.mxu0 %v633
        %1784 = vmatprep.subr.mxu0 0.0
        %1785 = vmatpush2.msra.mxu0 %v632
        %1786 = vmatprep.mubr.f32.mxu0 %v885
        %1787 = vmatmul.mubr.f32.gmra.mxu0 %v883
        %v1788 = vpop.f32.mrf.mxu0
        %v1789 = vadd.f32 %v1719, %v1788
        %v1790 = vpop.f32.mrf.mxu0
        %1791 = vdwg.mxu0
        %1792 = vmatprep.subr.mxu0 0.0
        %1793 = vmatpush1.msra.mxu0 %v663
        %1794 = vmatprep.subr.mxu0 0.0
        %1795 = vmatpush1.msra.mxu0 %v662
        %1796 = vmatprep.subr.mxu0 0.0
        %1797 = vmatpush1.msra.mxu0 %v661
        %1798 = vmatprep.subr.mxu0 0.0
        %1799 = vmatpush1.msra.mxu0 %v660
        %1800 = vmatprep.subr.mxu0 0.0
        %1801 = vmatpush1.msra.mxu0 %v659
        %1802 = vmatprep.subr.mxu0 0.0
        %1803 = vmatpush1.msra.mxu0 %v658
        %1804 = vmatprep.subr.mxu0 0.0
        %1805 = vmatpush1.msra.mxu0 %v657
        %1806 = vmatprep.subr.mxu0 0.0
        %1807 = vmatpush1.msra.mxu0 %v656
        %1808 = vmatprep.subr.mxu0 0.0
        %1809 = vmatpush1.msra.mxu0 %v655
        %1810 = vmatprep.subr.mxu0 0.0
        %1811 = vmatpush1.msra.mxu0 %v654
        %1812 = vmatprep.subr.mxu0 0.0
        %1813 = vmatpush1.msra.mxu0 %v653
        %1814 = vmatprep.subr.mxu0 0.0
        %1815 = vmatpush1.msra.mxu0 %v652
        %1816 = vmatprep.subr.mxu0 0.0
        %1817 = vmatpush1.msra.mxu0 %v651
        %1818 = vmatprep.subr.mxu0 0.0
        %1819 = vmatpush1.msra.mxu0 %v650
        %1820 = vmatprep.subr.mxu0 0.0
        %1821 = vmatpush1.msra.mxu0 %v649
        %1822 = vmatprep.subr.mxu0 0.0
        %1823 = vmatpush1.msra.mxu0 %v648
        %1824 = vmatprep.subr.mxu0 0.0
        %1825 = vmatpush2.msra.mxu0 %v679
        %1826 = vmatprep.subr.mxu0 0.0
        %1827 = vmatpush2.msra.mxu0 %v678
        %1828 = vmatprep.subr.mxu0 0.0
        %1829 = vmatpush2.msra.mxu0 %v677
        %1830 = vmatprep.subr.mxu0 0.0
        %1831 = vmatpush2.msra.mxu0 %v676
        %1832 = vmatprep.subr.mxu0 0.0
        %1833 = vmatpush2.msra.mxu0 %v675
        %1834 = vmatprep.subr.mxu0 0.0
        %1835 = vmatpush2.msra.mxu0 %v674
        %1836 = vmatprep.subr.mxu0 0.0
        %1837 = vmatpush2.msra.mxu0 %v673
        %1838 = vmatprep.subr.mxu0 0.0
        %1839 = vmatpush2.msra.mxu0 %v672
        %1840 = vmatprep.subr.mxu0 0.0
        %1841 = vmatpush2.msra.mxu0 %v671
        %1842 = vmatprep.subr.mxu0 0.0
        %1843 = vmatpush2.msra.mxu0 %v670
        %1844 = vmatprep.subr.mxu0 0.0
        %1845 = vmatpush2.msra.mxu0 %v669
        %1846 = vmatprep.subr.mxu0 0.0
        %1847 = vmatpush2.msra.mxu0 %v668
        %1848 = vmatprep.subr.mxu0 0.0
        %1849 = vmatpush2.msra.mxu0 %v667
        %1850 = vmatprep.subr.mxu0 0.0
        %1851 = vmatpush2.msra.mxu0 %v666
        %1852 = vmatprep.subr.mxu0 0.0
        %1853 = vmatpush2.msra.mxu0 %v665
        %1854 = vmatprep.subr.mxu0 0.0
        %1855 = vmatpush2.msra.mxu0 %v664
        %1856 = vmatprep.mubr.f32.mxu0 %v901
        %1857 = vmatmul.mubr.f32.gmra.mxu0 %v893
        %v1858 = vpop.f32.mrf.mxu0
        %v1859 = vadd.f32 %v1789, %v1858
        %v1860 = vpop.f32.mrf.mxu0
        %1861 = vdwg.mxu0
        %1862 = vmatprep.subr.mxu0 0.0
        %1863 = vmatpush1.msra.mxu0 %v695
        %1864 = vmatprep.subr.mxu0 0.0
        %1865 = vmatpush1.msra.mxu0 %v694
        %1866 = vmatprep.subr.mxu0 0.0
        %1867 = vmatpush1.msra.mxu0 %v693
        %1868 = vmatprep.subr.mxu0 0.0
        %1869 = vmatpush1.msra.mxu0 %v692
        %1870 = vmatprep.subr.mxu0 0.0
        %1871 = vmatpush1.msra.mxu0 %v691
        %1872 = vmatprep.subr.mxu0 0.0
        %1873 = vmatpush1.msra.mxu0 %v690
        %1874 = vmatprep.subr.mxu0 0.0
        %1875 = vmatpush1.msra.mxu0 %v689
        %1876 = vmatprep.subr.mxu0 0.0
        %1877 = vmatpush1.msra.mxu0 %v688
        %1878 = vmatprep.subr.mxu0 0.0
        %1879 = vmatpush1.msra.mxu0 %v687
        %1880 = vmatprep.subr.mxu0 0.0
        %1881 = vmatpush1.msra.mxu0 %v686
        %1882 = vmatprep.subr.mxu0 0.0
        %1883 = vmatpush1.msra.mxu0 %v685
        %1884 = vmatprep.subr.mxu0 0.0
        %1885 = vmatpush1.msra.mxu0 %v684
        %1886 = vmatprep.subr.mxu0 0.0
        %1887 = vmatpush1.msra.mxu0 %v683
        %1888 = vmatprep.subr.mxu0 0.0
        %1889 = vmatpush1.msra.mxu0 %v682
        %1890 = vmatprep.subr.mxu0 0.0
        %1891 = vmatpush1.msra.mxu0 %v681
        %1892 = vmatprep.subr.mxu0 0.0
        %1893 = vmatpush1.msra.mxu0 %v680
        %1894 = vmatprep.subr.mxu0 0.0
        %1895 = vmatpush2.msra.mxu0 %v711
        %1896 = vmatprep.subr.mxu0 0.0
        %1897 = vmatpush2.msra.mxu0 %v710
        %1898 = vmatprep.subr.mxu0 0.0
        %1899 = vmatpush2.msra.mxu0 %v709
        %1900 = vmatprep.subr.mxu0 0.0
        %1901 = vmatpush2.msra.mxu0 %v708
        %1902 = vmatprep.subr.mxu0 0.0
        %1903 = vmatpush2.msra.mxu0 %v707
        %1904 = vmatprep.subr.mxu0 0.0
        %1905 = vmatpush2.msra.mxu0 %v706
        %1906 = vmatprep.subr.mxu0 0.0
        %1907 = vmatpush2.msra.mxu0 %v705
        %1908 = vmatprep.subr.mxu0 0.0
        %1909 = vmatpush2.msra.mxu0 %v704
        %1910 = vmatprep.subr.mxu0 0.0
        %1911 = vmatpush2.msra.mxu0 %v703
        %1912 = vmatprep.subr.mxu0 0.0
        %1913 = vmatpush2.msra.mxu0 %v702
        %1914 = vmatprep.subr.mxu0 0.0
        %1915 = vmatpush2.msra.mxu0 %v701
        %1916 = vmatprep.subr.mxu0 0.0
        %1917 = vmatpush2.msra.mxu0 %v700
        %1918 = vmatprep.subr.mxu0 0.0
        %1919 = vmatpush2.msra.mxu0 %v699
        %1920 = vmatprep.subr.mxu0 0.0
        %1921 = vmatpush2.msra.mxu0 %v698
        %1922 = vmatprep.subr.mxu0 0.0
        %1923 = vmatpush2.msra.mxu0 %v697
        %1924 = vmatprep.subr.mxu0 0.0
        %1925 = vmatpush2.msra.mxu0 %v696
        %1926 = vmatprep.mubr.f32.mxu0 %v902
        %1927 = vmatmul.mubr.f32.gmra.mxu0 %v900
        %v1928 = vpop.f32.mrf.mxu0
        %v1929 = vadd.f32 %v1859, %v1928
        %v1930 = vpop.f32.mrf.mxu0
        %1931 = vdwg.mxu0
        %1932 = vmatprep.subr.mxu0 0.0
        %1933 = vmatpush1.msra.mxu0 %v727
        %1934 = vmatprep.subr.mxu0 0.0
        %1935 = vmatpush1.msra.mxu0 %v726
        %1936 = vmatprep.subr.mxu0 0.0
        %1937 = vmatpush1.msra.mxu0 %v725
        %1938 = vmatprep.subr.mxu0 0.0
        %1939 = vmatpush1.msra.mxu0 %v724
        %1940 = vmatprep.subr.mxu0 0.0
        %1941 = vmatpush1.msra.mxu0 %v723
        %1942 = vmatprep.subr.mxu0 0.0
        %1943 = vmatpush1.msra.mxu0 %v722
        %1944 = vmatprep.subr.mxu0 0.0
        %1945 = vmatpush1.msra.mxu0 %v721
        %1946 = vmatprep.subr.mxu0 0.0
        %1947 = vmatpush1.msra.mxu0 %v720
        %1948 = vmatprep.subr.mxu0 0.0
        %1949 = vmatpush1.msra.mxu0 %v719
        %1950 = vmatprep.subr.mxu0 0.0
        %1951 = vmatpush1.msra.mxu0 %v718
        %1952 = vmatprep.subr.mxu0 0.0
        %1953 = vmatpush1.msra.mxu0 %v717
        %1954 = vmatprep.subr.mxu0 0.0
        %1955 = vmatpush1.msra.mxu0 %v716
        %1956 = vmatprep.subr.mxu0 0.0
        %1957 = vmatpush1.msra.mxu0 %v715
        %1958 = vmatprep.subr.mxu0 0.0
        %1959 = vmatpush1.msra.mxu0 %v714
        %1960 = vmatprep.subr.mxu0 0.0
        %1961 = vmatpush1.msra.mxu0 %v713
        %1962 = vmatprep.subr.mxu0 0.0
        %1963 = vmatpush1.msra.mxu0 %v712
        %1964 = vmatprep.subr.mxu0 0.0
        %1965 = vmatpush2.msra.mxu0 %v743
        %1966 = vmatprep.subr.mxu0 0.0
        %1967 = vmatpush2.msra.mxu0 %v742
        %1968 = vmatprep.subr.mxu0 0.0
        %1969 = vmatpush2.msra.mxu0 %v741
        %1970 = vmatprep.subr.mxu0 0.0
        %1971 = vmatpush2.msra.mxu0 %v740
        %1972 = vmatprep.subr.mxu0 0.0
        %1973 = vmatpush2.msra.mxu0 %v739
        %1974 = vmatprep.subr.mxu0 0.0
        %1975 = vmatpush2.msra.mxu0 %v738
        %1976 = vmatprep.subr.mxu0 0.0
        %1977 = vmatpush2.msra.mxu0 %v737
        %1978 = vmatprep.subr.mxu0 0.0
        %1979 = vmatpush2.msra.mxu0 %v736
        %1980 = vmatprep.subr.mxu0 0.0
        %1981 = vmatpush2.msra.mxu0 %v735
        %1982 = vmatprep.subr.mxu0 0.0
        %1983 = vmatpush2.msra.mxu0 %v734
        %1984 = vmatprep.subr.mxu0 0.0
        %1985 = vmatpush2.msra.mxu0 %v733
        %1986 = vmatprep.subr.mxu0 0.0
        %1987 = vmatpush2.msra.mxu0 %v732
        %1988 = vmatprep.subr.mxu0 0.0
        %1989 = vmatpush2.msra.mxu0 %v731
        %1990 = vmatprep.subr.mxu0 0.0
        %1991 = vmatpush2.msra.mxu0 %v730
        %1992 = vmatprep.subr.mxu0 0.0
        %1993 = vmatpush2.msra.mxu0 %v729
        %1994 = vmatprep.subr.mxu0 0.0
        %1995 = vmatpush2.msra.mxu0 %v728
        %1996 = vmatprep.mubr.f32.mxu0 %v918
        %1997 = vmatmul.mubr.f32.gmra.mxu0 %v910
        %v1998 = vpop.f32.mrf.mxu0
        %v1999 = vadd.f32 %v1929, %v1998
        %v2000 = vpop.f32.mrf.mxu0
        %2001 = vdwg.mxu0
        %2002 = vmatprep.subr.mxu0 0.0
        %2003 = vmatpush1.msra.mxu0 %v759
        %2004 = vmatprep.subr.mxu0 0.0
        %2005 = vmatpush1.msra.mxu0 %v758
        %2006 = vmatprep.subr.mxu0 0.0
        %2007 = vmatpush1.msra.mxu0 %v757
        %2008 = vmatprep.subr.mxu0 0.0
        %2009 = vmatpush1.msra.mxu0 %v756
        %2010 = vmatprep.subr.mxu0 0.0
        %2011 = vmatpush1.msra.mxu0 %v755
        %2012 = vmatprep.subr.mxu0 0.0
        %2013 = vmatpush1.msra.mxu0 %v754
        %2014 = vmatprep.subr.mxu0 0.0
        %2015 = vmatpush1.msra.mxu0 %v753
        %2016 = vmatprep.subr.mxu0 0.0
        %2017 = vmatpush1.msra.mxu0 %v752
        %2018 = vmatprep.subr.mxu0 0.0
        %2019 = vmatpush1.msra.mxu0 %v751
        %2020 = vmatprep.subr.mxu0 0.0
        %2021 = vmatpush1.msra.mxu0 %v750
        %2022 = vmatprep.subr.mxu0 0.0
        %2023 = vmatpush1.msra.mxu0 %v749
        %2024 = vmatprep.subr.mxu0 0.0
        %2025 = vmatpush1.msra.mxu0 %v748
        %2026 = vmatprep.subr.mxu0 0.0
        %2027 = vmatpush1.msra.mxu0 %v747
        %2028 = vmatprep.subr.mxu0 0.0
        %2029 = vmatpush1.msra.mxu0 %v746
        %2030 = vmatprep.subr.mxu0 0.0
        %2031 = vmatpush1.msra.mxu0 %v745
        %2032 = vmatprep.subr.mxu0 0.0
        %2033 = vmatpush1.msra.mxu0 %v744
        %2034 = vmatprep.subr.mxu0 0.0
        %2035 = vmatpush2.msra.mxu0 %v775
        %2036 = vmatprep.subr.mxu0 0.0
        %2037 = vmatpush2.msra.mxu0 %v774
        %2038 = vmatprep.subr.mxu0 0.0
        %2039 = vmatpush2.msra.mxu0 %v773
        %2040 = vmatprep.subr.mxu0 0.0
        %2041 = vmatpush2.msra.mxu0 %v772
        %2042 = vmatprep.subr.mxu0 0.0
        %2043 = vmatpush2.msra.mxu0 %v771
        %2044 = vmatprep.subr.mxu0 0.0
        %2045 = vmatpush2.msra.mxu0 %v770
        %2046 = vmatprep.subr.mxu0 0.0
        %2047 = vmatpush2.msra.mxu0 %v769
        %2048 = vmatprep.subr.mxu0 0.0
        %2049 = vmatpush2.msra.mxu0 %v768
        %2050 = vmatprep.subr.mxu0 0.0
        %2051 = vmatpush2.msra.mxu0 %v767
        %2052 = vmatprep.subr.mxu0 0.0
        %2053 = vmatpush2.msra.mxu0 %v766
        %2054 = vmatprep.subr.mxu0 0.0
        %2055 = vmatpush2.msra.mxu0 %v765
        %2056 = vmatprep.subr.mxu0 0.0
        %2057 = vmatpush2.msra.mxu0 %v764
        %2058 = vmatprep.subr.mxu0 0.0
        %2059 = vmatpush2.msra.mxu0 %v763
        %2060 = vmatprep.subr.mxu0 0.0
        %2061 = vmatpush2.msra.mxu0 %v762
        %2062 = vmatprep.subr.mxu0 0.0
        %2063 = vmatpush2.msra.mxu0 %v761
        %2064 = vmatprep.subr.mxu0 0.0
        %2065 = vmatpush2.msra.mxu0 %v760
        %2066 = vmatprep.mubr.f32.mxu0 %v919
        %2067 = vmatmul.mubr.f32.gmra.mxu0 %v917
        %v2068 = vpop.f32.mrf.mxu0
        %v2069 = vadd.f32 %v1999, %v2068
        %v2070 = vpop.f32.mrf.mxu0
        %2071 = vdwg.mxu0
        %v2072 = vadd.f32 %v255, %v2069
        %2073 = vst [vmem:[#allocation2] sm:$0x3] %v2072
        %p2074 = scmp.eq.s32.totalorder %s26, 1
        // Predicated region
        $region49: #{tpu_custom_call.1} parent=31 // pred_check
          %p2075 = pneg %p2074
        $region50: #{tpu_custom_call.1} parent=31 // pred_check_branch
          %2077 = sbr.rel (%p2075) target = $region52
        $region51: #{tpu_custom_call.1} parent=31 // pred_region
          %v2078 = vld [vmem:[#allocation2] sm:$0x3]
          %v2079 = vld [vmem:[#allocation8] sm:$0x1]
          %v2081 = vlaneseq
          %v2082 = vshrl.u32 %v2081, 7
          %v2083 = vsub.s32 0, %v2082
          %v2084 = vrot.slane %v2079, %v2083
          %v2086 = vadd.f32 %v2078, %v2084
          %2087 = vst [vmem:[#allocation9] sm:$0x3] %v2086
        $region52: #{tpu_custom_call.1} parent=31 // pred_fallthru
          _
        // Predicated region
        $region53: #{tpu_custom_call.1} parent=31 // pred_check
          %p2088 = pneg %p126
        $region54: #{tpu_custom_call.1} parent=31 // pred_check_branch
          %2090 = sbr.rel (%p2088) target = $region56
        $region55: #{tpu_custom_call.1} parent=31 // pred_region
          %s2092 = ssub.s32 32, 32
          %2093 = vsyncadd [#allocation5], %s2092
          %s2094 = smul.addr %s25, 32
          %s2095 = scalar_lea.hbm %s3, %s2094
          %s2097 = sshll.u32 [#allocation9], 4
          %s2098 = int_to_ptr.vmem [resolvable:$true] %s2097
          %2100 = dma.vmem_to_hbm [thread:$0]  %s2098, 32, %s2095, [#allocation5]
        $region56: #{tpu_custom_call.1} parent=31 // pred_fallthru
          _
        // Predicated region
        $region57: #{tpu_custom_call.1} parent=31 // pred_check
          %p2101 = pneg %p126
        $region58: #{tpu_custom_call.1} parent=31 // pred_check_branch
          %2103 = sbr.rel (%p2101) target = $region60
        $region59: #{tpu_custom_call.1} parent=31 // pred_region
          %2104 = dma.done [#allocation5], 32
        $region60: #{tpu_custom_call.1} parent=31 // pred_fallthru
          _
      $region32: #{tpu_custom_call.1} parent=5 // pred_fallthru
        _
      %p2105 = scmp.le.s32.totalorder 2, %s16
      // Predicated region
      $region61: #{tpu_custom_call.1} parent=5 // pred_check
        %p2106 = pneg %p2105
      $region62: #{tpu_custom_call.1} parent=5 // pred_check_branch
        %2108 = sbr.rel (%p2106) target = $region64
      $region63: #{tpu_custom_call.1} parent=5 // pred_region
        %s2109 = ssub.s32 %s16, 2
      $region64: #{tpu_custom_call.1} parent=5 // pred_fallthru
        _
    $region6: #{tpu_custom_call.1} parent=1 // loop_footer
      %s20 = sadd.s32 1, %s16
    $region7: #{tpu_custom_call.1} parent=1 // loop_footer_branch
      %15 = sbr.rel target = $region3
    $region8: #{tpu_custom_call.1} parent=1 // loop_exit
      _
    %2110 = vsyncpa [#allocation4], 1
    %s2111 = scalar_lea.sflag [#allocation4], 1
    %2112 = vsyncpa %s2111, 1
    %2113 = vsyncpa [#allocation7], 1
    %s2114 = scalar_lea.sflag [#allocation7], 1
    %2115 = vsyncpa %s2114, 1
    %2116 = vsyncpa [#allocation5], 1
    %s2117 = scalar_lea.sflag [#allocation5], 1
    %2118 = vsyncpa %s2117, 1

</llo_original>
